<compile_context>
chip_gen: v6e
topology: v6e:2x2x1
jax: 0.10.0
libtpu: 0.0.40
codegen_flags: <defaults>
</compile_context>

<pallas_src>
import numpy as np
import jax
import jax.numpy as jnp
from jax.experimental import pallas as pl
from jax.experimental.pallas import tpu as pltpu

# ----- static config: LambdaBottleneck1d(in_planes=16, planes=16, stride=1) -----
IN_PLANES = 16
PLANES = 16
EXPANSION = 4
OUT_PLANES = EXPANSION * PLANES        # 64
NHEAD = 4
DIM_K = 16
DIM_U = 4
DIM_M = 7
DIM_V = PLANES // NHEAD                # 4
PAD = (DIM_M - 1) // 2                 # 3
BATCH = 2
SEQLEN = 128
BN_EPS = 1e-5

# packed-parameter row offsets (all multiples of 8 -> sublane-tile aligned static slices)
R_XS = PLANES + OUT_PLANES             # 80  : conv1 rows (16) + shortcut rows (64)
R_Q = NHEAD * DIM_K                    # 64
R_K = DIM_K * DIM_U                    # 64
R_V = DIM_V * DIM_U                    # 16
R_QKV = R_Q + R_K + R_V                # 144
OFF_QKV = R_XS                         # 80
OFF_W3 = R_XS + R_QKV                  # 224
W_ROWS = OFF_W3 + OUT_PLANES           # 288
B_S2 = OFF_W3                          # 224
B_T2 = B_S2 + PLANES                   # 240
B_B3 = B_T2 + PLANES                   # 256
BIAS_ROWS = B_B3 + OUT_PLANES          # 320


# ----------------------------------- kernel -----------------------------------
def lambda_bottleneck_kernel(x_ref, w_ref, wp_ref, bias_ref, mask_ref, o_ref):
    f32 = jnp.float32
    b = x_ref.shape[0]
    n = x_ref.shape[2]
    bn = b * n

    w_all = w_ref[...]                       # (288, 16) packed weights
    bias = bias_ref[...]                     # (320, 1)  packed bias / scale columns
    masks = mask_ref[...]                    # (DIM_M, bn) per-shift validity masks

    def shift(a, s):
        # a'[..., col] = a[..., col + s] within each length-n batch block, zero outside.
        rolled = pltpu.roll(a, shift=(-s) % bn, axis=a.ndim - 1)
        return rolled * masks[s + PAD:s + PAD + 1, :]

    # ---- fold batch into the lane axis: (B, Cin, N) -> (Cin, B*N) ----
    xf = x_ref[...].astype(f32)
    x2d = jnp.concatenate([xf[i] for i in range(b)], axis=-1)                  # (16, bn)

    # ---- conv1(+bn1) and shortcut conv(+bn) fused into ONE matmul ----
    t0 = jnp.dot(w_all[0:R_XS], x2d, preferred_element_type=f32) + bias[0:R_XS]
    h1 = jnp.maximum(t0[0:PLANES], 0.0)                                        # (16, bn)
    sc = t0[PLANES:R_XS]                                                       # (64, bn)

    # ---- fused Q / K / V projections (BN folded, keys un-biased) ----
    qkv = jnp.dot(w_all[OFF_QKV:OFF_W3], h1, preferred_element_type=f32) + bias[OFF_QKV:OFF_W3]
    q = qkv[0:R_Q]                     # (64, bn) rows h*DIM_K + k
    kraw = qkv[R_Q:R_Q + R_K]          # (64, bn) rows u*DIM_K + k
    vp = qkv[R_Q + R_K:R_QKV]          # (16, bn) rows r: values[v=r%4, u=r//4] (pre-permuted)

    # ---- softmax over the sequence (per batch block); global row max is equivalent ----
    kexp = jnp.exp(kraw - jnp.max(kraw, axis=-1, keepdims=True))               # (64, bn)

    # ---- lambda_c (content lambda), per batch, stored transposed as (v, k) ----
    lam_ct = []
    for i in range(b):
        keb = kexp[:, i * n:(i + 1) * n]                                       # (64, n)
        inv = pl.reciprocal(jnp.sum(keb, axis=-1, keepdims=True), approx=True)
        ksm = keb * inv                                                        # softmax keys
        vpb = vp[:, i * n:(i + 1) * n]                                         # (16, n)
        acc = jnp.zeros((DIM_V, DIM_K), f32)
        for u in range(DIM_U):
            acc = acc + jax.lax.dot_general(
                vpb[u * DIM_V:(u + 1) * DIM_V], ksm[u * DIM_K:(u + 1) * DIM_K],
                (((1,), (1,)), ((), ())), preferred_element_type=f32)
        lam_ct.append(acc)                                                     # (4, 16)

    # ---- lambda_p (position lambdas): ONE MXU dot against the block-diag embedding ----
    shifted = [vp if m == PAD else shift(vp, m - PAD) for m in range(DIM_M)]
    stacked = jnp.concatenate(shifted, axis=0)                                 # (112, bn)
    lam_p = jnp.dot(wp_ref[...], stacked, preferred_element_type=f32)          # (64, bn) rows v*DIM_K+k
    lp3 = lam_p.reshape(DIM_V, DIM_K, bn)                                      # (v, k, col)

    # fold the per-batch content lambda in so y_c + y_p share one contraction
    lam_ct_full = jnp.concatenate(
        [jnp.broadcast_to(lam_ct[i][:, :, None], (DIM_V, DIM_K, n)) for i in range(b)],
        axis=-1)                                                               # (v, k, bn)
    ltot = lp3 + lam_ct_full

    # ---- y = y_c + y_p : per head, contract over k (elementwise mul + sublane reduce) ----
    heads = []
    for h in range(NHEAD):
        qh = q[h * DIM_K:(h + 1) * DIM_K, :]                                   # (16, bn)
        heads.append(jnp.sum(ltot * qh[None, :, :], axis=1))                   # (DIM_V, bn)
    lam_out = jnp.concatenate(heads, axis=0)                                   # (16, bn) rows h*DIM_V+v

    # ---- AvgPool1d(3, stride=1, pad=1, count_include_pad) + bn2 + relu ----
    ap = (shift(lam_out, -1) + lam_out + shift(lam_out, 1)) * (1.0 / 3.0)
    h2 = jnp.maximum(ap * bias[B_S2:B_T2] + bias[B_T2:B_B3], 0.0)              # (16, bn)

    # ---- conv3 (+bn3), residual add with shortcut, final relu ----
    out3 = jnp.dot(w_all[OFF_W3:W_ROWS], h2, preferred_element_type=f32) + bias[B_B3:BIAS_ROWS]
    res = jnp.maximum(out3 + sc, 0.0)                                          # (64, bn)

    for i in range(b):
        o_ref[i, :, :] = res[:, i * n:(i + 1) * n].astype(o_ref.dtype)


# ----------------------------------- wrapper -----------------------------------
def _make_shift_masks(b, n):
    col = np.arange(b * n) % n
    rows = [((col + (m - PAD) >= 0) & (col + (m - PAD) < n)).astype(np.float32)
            for m in range(DIM_M)]
    return jnp.asarray(np.stack(rows, axis=0))                                 # (DIM_M, b*n)


def lambda_bottleneck_forward(x, kernel_params):
    w_all, wp, bias_all = kernel_params
    b, cin, n = x.shape
    masks = _make_shift_masks(b, n)
    grid_spec = pltpu.PrefetchScalarGridSpec(
        num_scalar_prefetch=0,
        grid=(1,),
        in_specs=[
            pl.BlockSpec((b, cin, n), lambda i: (0, 0, 0)),
            pl.BlockSpec((W_ROWS, IN_PLANES), lambda i: (0, 0)),
            pl.BlockSpec((DIM_V * DIM_K, DIM_M * DIM_V * DIM_U), lambda i: (0, 0)),
            pl.BlockSpec((BIAS_ROWS, 1), lambda i: (0, 0)),
            pl.BlockSpec((DIM_M, b * n), lambda i: (0, 0)),
        ],
        out_specs=pl.BlockSpec((b, OUT_PLANES, n), lambda i: (0, 0, 0)),
    )
    return pl.pallas_call(
        lambda_bottleneck_kernel,
        out_shape=jax.ShapeDtypeStruct((b, OUT_PLANES, n), jnp.float32),
        grid_spec=grid_spec,
        compiler_params=pltpu.CompilerParams(dimension_semantics=("arbitrary",)),
    )(x, w_all, wp, bias_all, masks)


# ----------------------- parameter construction (deterministic) -----------------------
def _bn_params(key, c):
    k1, k2, k3, k4 = jax.random.split(key, 4)
    gamma = 1.0 + 0.1 * jax.random.normal(k1, (c,), jnp.float32)
    beta = 0.1 * jax.random.normal(k2, (c,), jnp.float32)
    mean = 0.1 * jax.random.normal(k3, (c,), jnp.float32)
    var = 0.9 + 0.2 * jax.random.uniform(k4, (c,), jnp.float32)
    return gamma, beta, mean, var


def _bn_fold(bn):
    gamma, beta, mean, var = bn
    scale = gamma / jnp.sqrt(var + BN_EPS)
    shift = beta - mean * scale
    return scale, shift


def make_params(key):
    ks = jax.random.split(key, 16)
    nrm = lambda k, shape, s=0.2: s * jax.random.normal(k, shape, jnp.float32)

    W1 = nrm(ks[0], (PLANES, IN_PLANES));            bn1 = _bn_params(ks[1], PLANES)
    Wq = nrm(ks[2], (DIM_K * NHEAD, PLANES));        bnq = _bn_params(ks[3], DIM_K * NHEAD)
    Wk = nrm(ks[4], (DIM_K * DIM_U, PLANES))
    Wv = nrm(ks[5], (DIM_V * DIM_U, PLANES));        bnv = _bn_params(ks[6], DIM_V * DIM_U)
    E = nrm(ks[7], (DIM_K, DIM_U, DIM_M))            # torch param is (k,u,1,m); unit dim dropped
    bn2 = _bn_params(ks[8], PLANES)
    W3 = nrm(ks[9], (OUT_PLANES, PLANES));           bn3 = _bn_params(ks[10], OUT_PLANES)
    Ws = nrm(ks[11], (OUT_PLANES, IN_PLANES))
    bsc = 0.1 * jax.random.normal(ks[12], (OUT_PLANES,), jnp.float32)   # shortcut conv bias
    bns = _bn_params(ks[13], OUT_PLANES)

    raw = (W1, bn1, Wq, bnq, Wk, Wv, bnv, E, bn2, W3, bn3, Ws, bsc, bns)

    # ---- fold BN affines into the 1x1 convs and permute rows for the kernel layout ----
    col = lambda v: v[:, None]
    s1, t1 = _bn_fold(bn1); w1f, b1 = s1[:, None] * W1, col(t1)
    sq, tq = _bn_fold(bnq); wqf, bq = sq[:, None] * Wq, col(tq)
    sv, tv = _bn_fold(bnv); wvf, bvf = sv[:, None] * Wv, tv
    s2, t2 = _bn_fold(bn2)
    s3, t3 = _bn_fold(bn3); w3f, b3 = s3[:, None] * W3, col(t3)
    ss, ts = _bn_fold(bns); wsf, bsf = ss[:, None] * Ws, col(ss * bsc + ts)

    # keys: kernel row u*DIM_K + k  <-  original channel k*DIM_U + u
    perm_k = jnp.array([(r % DIM_K) * DIM_U + r // DIM_K for r in range(DIM_K * DIM_U)])
    wkp = Wk[perm_k]
    # values: kernel row r  <-  original flat channel (r % DIM_V) * DIM_U + r // DIM_V
    perm_v = jnp.array([(r % DIM_V) * DIM_U + r // DIM_V for r in range(DIM_V * DIM_U)])
    wvp, bvp = wvf[perm_v], col(bvf[perm_v])

    # ---- pack everything the kernel needs into 3 arrays (plus host-built shift masks) ----
    w_all = jnp.concatenate([w1f, wsf, wqf, wkp, wvp, w3f], axis=0)            # (288, 16)
    bias_all = jnp.concatenate(
        [b1, bsf, bq, jnp.zeros((R_K, 1), jnp.float32), bvp,
         col(s2), col(t2), b3], axis=0)                                        # (320, 1)
    # block-diagonal rearrangement of the local-context embedding:
    #   wp[v*DIM_K + k, m*(DIM_V*DIM_U) + v'*DIM_U + u] = E[k, u, m] * (v == v')
    wp = jnp.einsum('kum,vw->vkmwu', E, jnp.eye(DIM_V, dtype=jnp.float32))
    wp = wp.reshape(DIM_V * DIM_K, DIM_M * DIM_V * DIM_U)                      # (64, 112)

    return raw, (w_all, wp, bias_all)


# ----------------------- pure-JAX reference (mirrors the PyTorch code) -----------------------
def reference_forward(x, raw):
    (W1, bn1, Wq, bnq, Wk, Wv, bnv, E, bn2, W3, bn3, Ws, bsc, bns) = raw

    def conv1x1(w, x, b=None):
        y = jnp.einsum('oi,bin->bon', w, x)
        return y if b is None else y + b[None, :, None]

    def bn(x, p):
        g, bt, m, v = p
        return (x - m[None, :, None]) / jnp.sqrt(v[None, :, None] + BN_EPS) * g[None, :, None] \
            + bt[None, :, None]

    bsz, _, n = x.shape
    h1 = jax.nn.relu(bn(conv1x1(W1, x), bn1))
    q = bn(conv1x1(Wq, h1), bnq).reshape(bsz, NHEAD, DIM_K, n)
    k = jax.nn.softmax(conv1x1(Wk, h1).reshape(bsz, DIM_K, DIM_U, n), axis=-1)
    vflat = bn(conv1x1(Wv, h1), bnv)
    vals = vflat.reshape(bsz, DIM_V, DIM_U, n)
    lam_c = jnp.einsum('bkum,bvum->bkv', k, vals)
    y_c = jnp.einsum('bhkn,bkv->bhvn', q, lam_c)
    v2 = vflat.reshape(bsz, DIM_U, DIM_V, n)
    v2p = jnp.pad(v2, ((0, 0), (0, 0), (0, 0), (PAD, PAD)))
    lam_p = jnp.zeros((bsz, DIM_K, DIM_V, n), jnp.float32)
    for m in range(DIM_M):
        lam_p = lam_p + jnp.einsum('ku,buvn->bkvn', E[:, :, m], v2p[..., m:m + n])
    y_p = jnp.einsum('bhkn,bkvn->bhvn', q, lam_p)
    lam_out = (y_c + y_p).reshape(bsz, PLANES, n)
    lp = jnp.pad(lam_out, ((0, 0), (0, 0), (1, 1)))
    ap = (lp[:, :, 0:n] + lp[:, :, 1:n + 1] + lp[:, :, 2:n + 2]) / 3.0
    h2 = jax.nn.relu(bn(ap, bn2))
    o3 = bn(conv1x1(W3, h2), bn3)
    sc = bn(conv1x1(Ws, x, bsc), bns)
    return jax.nn.relu(o3 + sc)


if __name__ == "__main__":
    key = jax.random.PRNGKey(0)
    kx, kp = jax.random.split(key)
    x = 0.5 * jax.random.normal(kx, (BATCH, IN_PLANES, SEQLEN), jnp.float32)

    raw, kernel_params = make_params(kp)

    out = jax.block_until_ready(lambda_bottleneck_forward(x, kernel_params))

    with jax.default_matmul_precision("float32"):
        ref = jax.block_until_ready(reference_forward(x, raw))

    np.testing.assert_allclose(np.asarray(out), np.asarray(ref), rtol=5e-3, atol=5e-3)
    assert np.all(np.isfinite(np.asarray(out)))
    print("KERNEL_OK")
</pallas_src>

<mosaic_0001>
module attributes {stable_mosaic.version = 11 : i64} {
  func.func @lambda_bottleneck_kernel(%arg0: i32, %arg1: memref<2x16x128xf32, #tpu.memory_space<vmem>>, %arg2: memref<288x16xf32, #tpu.memory_space<vmem>>, %arg3: memref<64x112xf32, #tpu.memory_space<vmem>>, %arg4: memref<320x1xf32, #tpu.memory_space<vmem>>, %arg5: memref<7x256xf32, #tpu.memory_space<vmem>>, %arg6: memref<2x64x128xf32, #tpu.memory_space<vmem>>) attributes {dimension_semantics = [#tpu.dimension_semantics<arbitrary>], iteration_bounds = array<i64: 1>, scalar_prefetch = 0 : i64, scratch_operands = 0 : i64, tpu.core_type = #tpu.core_type<tc>, window_params = [{pipeline_mode = #tpu.pipeline_mode<synchronous>, transform_indices = @transform_0, window_bounds = array<i64: 2, 16, 128>}, {pipeline_mode = #tpu.pipeline_mode<synchronous>, transform_indices = @transform_1, window_bounds = array<i64: 288, 16>}, {pipeline_mode = #tpu.pipeline_mode<synchronous>, transform_indices = @transform_2, window_bounds = array<i64: 64, 112>}, {pipeline_mode = #tpu.pipeline_mode<synchronous>, transform_indices = @transform_3, window_bounds = array<i64: 320, 1>}, {pipeline_mode = #tpu.pipeline_mode<synchronous>, transform_indices = @transform_4, window_bounds = array<i64: 7, 256>}, {pipeline_mode = #tpu.pipeline_mode<synchronous>, transform_indices = @transform_5, window_bounds = array<i64: 2, 64, 128>}]} {
    %c0 = arith.constant 0 : index
    %c0_0 = arith.constant 0 : index
    %0 = vector.load %arg2[%c0, %c0_0] : memref<288x16xf32, #tpu.memory_space<vmem>>, vector<288x16xf32>
    %c0_1 = arith.constant 0 : index
    %c0_2 = arith.constant 0 : index
    %1 = vector.load %arg4[%c0_1, %c0_2] : memref<320x1xf32, #tpu.memory_space<vmem>>, vector<320x1xf32>
    %c0_3 = arith.constant 0 : index
    %c0_4 = arith.constant 0 : index
    %2 = vector.load %arg5[%c0_3, %c0_4] : memref<7x256xf32, #tpu.memory_space<vmem>>, vector<7x256xf32>
    %c0_5 = arith.constant 0 : index
    %c0_6 = arith.constant 0 : index
    %c0_7 = arith.constant 0 : index
    %3 = vector.load %arg1[%c0_5, %c0_6, %c0_7] : memref<2x16x128xf32, #tpu.memory_space<vmem>>, vector<2x16x128xf32>
    %4 = vector.extract_strided_slice %3 {offsets = [0, 0, 0], sizes = [1, 16, 128], strides = [1, 1, 1]} : vector<2x16x128xf32> to vector<1x16x128xf32>
    %5 = vector.shape_cast %4 : vector<1x16x128xf32> to vector<16x128xf32>
    %6 = vector.extract_strided_slice %3 {offsets = [1, 0, 0], sizes = [1, 16, 128], strides = [1, 1, 1]} : vector<2x16x128xf32> to vector<1x16x128xf32>
    %7 = vector.shape_cast %6 : vector<1x16x128xf32> to vector<16x128xf32>
    %8 = tpu.concatenate %5, %7 in 1 : vector<16x128xf32>, vector<16x128xf32> -> vector<16x256xf32>
    %9 = vector.extract_strided_slice %0 {offsets = [0, 0], sizes = [80, 16], strides = [1, 1]} : vector<288x16xf32> to vector<80x16xf32>
    %cst = arith.constant dense<0.000000e+00> : vector<80x256xf32>
    %10 = tpu.matmul %9, %8, %cst {dimension_numbers = #tpu.dot_dimension_numbers<[1], [0], [0], [1], [0, 0, 1, 1], [], []>} : vector<80x16xf32>, vector<16x256xf32>, vector<80x256xf32> -> vector<80x256xf32>
    %11 = vector.extract_strided_slice %1 {offsets = [0, 0], sizes = [80, 1], strides = [1, 1]} : vector<320x1xf32> to vector<80x1xf32>
    %12 = vector.broadcast %11 : vector<80x1xf32> to vector<80x256xf32>
    %13 = arith.addf %10, %12 : vector<80x256xf32>
    %14 = vector.extract_strided_slice %13 {offsets = [0, 0], sizes = [16, 256], strides = [1, 1]} : vector<80x256xf32> to vector<16x256xf32>
    %cst_8 = arith.constant 0.000000e+00 : f32
    %15 = vector.broadcast %cst_8 : f32 to vector<16x256xf32>
    %16 = arith.maximumf %14, %15 : vector<16x256xf32>
    %17 = vector.extract_strided_slice %13 {offsets = [16, 0], sizes = [64, 256], strides = [1, 1]} : vector<80x256xf32> to vector<64x256xf32>
    %18 = vector.extract_strided_slice %0 {offsets = [80, 0], sizes = [144, 16], strides = [1, 1]} : vector<288x16xf32> to vector<144x16xf32>
    %cst_9 = arith.constant dense<0.000000e+00> : vector<144x256xf32>
    %19 = tpu.matmul %18, %16, %cst_9 {dimension_numbers = #tpu.dot_dimension_numbers<[1], [0], [0], [1], [0, 0, 1, 1], [], []>} : vector<144x16xf32>, vector<16x256xf32>, vector<144x256xf32> -> vector<144x256xf32>
    %20 = vector.extract_strided_slice %1 {offsets = [80, 0], sizes = [144, 1], strides = [1, 1]} : vector<320x1xf32> to vector<144x1xf32>
    %21 = vector.broadcast %20 : vector<144x1xf32> to vector<144x256xf32>
    %22 = arith.addf %19, %21 : vector<144x256xf32>
    %23 = vector.extract_strided_slice %22 {offsets = [0, 0], sizes = [64, 256], strides = [1, 1]} : vector<144x256xf32> to vector<64x256xf32>
    %24 = vector.extract_strided_slice %22 {offsets = [64, 0], sizes = [64, 256], strides = [1, 1]} : vector<144x256xf32> to vector<64x256xf32>
    %25 = vector.extract_strided_slice %22 {offsets = [128, 0], sizes = [16, 256], strides = [1, 1]} : vector<144x256xf32> to vector<16x256xf32>
    %cst_10 = arith.constant dense<0xFF800000> : vector<64xf32>
    %26 = vector.multi_reduction <maximumf>, %24, %cst_10 [1] : vector<64x256xf32> to vector<64xf32>
    %27 = vector.shape_cast %26 : vector<64xf32> to vector<64x1xf32>
    %28 = vector.broadcast %27 : vector<64x1xf32> to vector<64x256xf32>
    %29 = arith.subf %24, %28 : vector<64x256xf32>
    %30 = math.exp %29 : vector<64x256xf32>
    %31 = vector.extract_strided_slice %30 {offsets = [0, 0], sizes = [64, 128], strides = [1, 1]} : vector<64x256xf32> to vector<64x128xf32>
    %cst_11 = arith.constant dense<0.000000e+00> : vector<64xf32>
    %32 = vector.multi_reduction <add>, %31, %cst_11 [1] : vector<64x128xf32> to vector<64xf32>
    %33 = vector.shape_cast %32 : vector<64xf32> to vector<64x1xf32>
    %34 = tpu.reciprocal %33 {approx = true} : vector<64x1xf32> -> vector<64x1xf32>
    %35 = vector.broadcast %34 : vector<64x1xf32> to vector<64x128xf32>
    %36 = arith.mulf %31, %35 : vector<64x128xf32>
    %37 = vector.extract_strided_slice %25 {offsets = [0, 0], sizes = [16, 128], strides = [1, 1]} : vector<16x256xf32> to vector<16x128xf32>
    %cst_12 = arith.constant 0.000000e+00 : f32
    %38 = vector.broadcast %cst_12 : f32 to vector<4x16xf32>
    %39 = vector.extract_strided_slice %37 {offsets = [0, 0], sizes = [4, 128], strides = [1, 1]} : vector<16x128xf32> to vector<4x128xf32>
    %40 = vector.extract_strided_slice %36 {offsets = [0, 0], sizes = [16, 128], strides = [1, 1]} : vector<64x128xf32> to vector<16x128xf32>
    %cst_13 = arith.constant dense<0.000000e+00> : vector<4x16xf32>
    %41 = tpu.matmul %39, %40, %cst_13 {dimension_numbers = #tpu.dot_dimension_numbers<[1], [1], [0], [0], [0, 0, 1, 0], [], []>} : vector<4x128xf32>, vector<16x128xf32>, vector<4x16xf32> -> vector<4x16xf32>
    %42 = arith.addf %38, %41 : vector<4x16xf32>
    %43 = vector.extract_strided_slice %37 {offsets = [4, 0], sizes = [4, 128], strides = [1, 1]} : vector<16x128xf32> to vector<4x128xf32>
    %44 = vector.extract_strided_slice %36 {offsets = [16, 0], sizes = [16, 128], strides = [1, 1]} : vector<64x128xf32> to vector<16x128xf32>
    %cst_14 = arith.constant dense<0.000000e+00> : vector<4x16xf32>
    %45 = tpu.matmul %43, %44, %cst_14 {dimension_numbers = #tpu.dot_dimension_numbers<[1], [1], [0], [0], [0, 0, 1, 0], [], []>} : vector<4x128xf32>, vector<16x128xf32>, vector<4x16xf32> -> vector<4x16xf32>
    %46 = arith.addf %42, %45 : vector<4x16xf32>
    %47 = vector.extract_strided_slice %37 {offsets = [8, 0], sizes = [4, 128], strides = [1, 1]} : vector<16x128xf32> to vector<4x128xf32>
    %48 = vector.extract_strided_slice %36 {offsets = [32, 0], sizes = [16, 128], strides = [1, 1]} : vector<64x128xf32> to vector<16x128xf32>
    %cst_15 = arith.constant dense<0.000000e+00> : vector<4x16xf32>
    %49 = tpu.matmul %47, %48, %cst_15 {dimension_numbers = #tpu.dot_dimension_numbers<[1], [1], [0], [0], [0, 0, 1, 0], [], []>} : vector<4x128xf32>, vector<16x128xf32>, vector<4x16xf32> -> vector<4x16xf32>
    %50 = arith.addf %46, %49 : vector<4x16xf32>
    %51 = vector.extract_strided_slice %37 {offsets = [12, 0], sizes = [4, 128], strides = [1, 1]} : vector<16x128xf32> to vector<4x128xf32>
    %52 = vector.extract_strided_slice %36 {offsets = [48, 0], sizes = [16, 128], strides = [1, 1]} : vector<64x128xf32> to vector<16x128xf32>
    %cst_16 = arith.constant dense<0.000000e+00> : vector<4x16xf32>
    %53 = tpu.matmul %51, %52, %cst_16 {dimension_numbers = #tpu.dot_dimension_numbers<[1], [1], [0], [0], [0, 0, 1, 0], [], []>} : vector<4x128xf32>, vector<16x128xf32>, vector<4x16xf32> -> vector<4x16xf32>
    %54 = arith.addf %50, %53 : vector<4x16xf32>
    %55 = vector.extract_strided_slice %30 {offsets = [0, 128], sizes = [64, 128], strides = [1, 1]} : vector<64x256xf32> to vector<64x128xf32>
    %cst_17 = arith.constant dense<0.000000e+00> : vector<64xf32>
    %56 = vector.multi_reduction <add>, %55, %cst_17 [1] : vector<64x128xf32> to vector<64xf32>
    %57 = vector.shape_cast %56 : vector<64xf32> to vector<64x1xf32>
    %58 = tpu.reciprocal %57 {approx = true} : vector<64x1xf32> -> vector<64x1xf32>
    %59 = vector.broadcast %58 : vector<64x1xf32> to vector<64x128xf32>
    %60 = arith.mulf %55, %59 : vector<64x128xf32>
    %61 = vector.extract_strided_slice %25 {offsets = [0, 128], sizes = [16, 128], strides = [1, 1]} : vector<16x256xf32> to vector<16x128xf32>
    %cst_18 = arith.constant 0.000000e+00 : f32
    %62 = vector.broadcast %cst_18 : f32 to vector<4x16xf32>
    %63 = vector.extract_strided_slice %61 {offsets = [0, 0], sizes = [4, 128], strides = [1, 1]} : vector<16x128xf32> to vector<4x128xf32>
    %64 = vector.extract_strided_slice %60 {offsets = [0, 0], sizes = [16, 128], strides = [1, 1]} : vector<64x128xf32> to vector<16x128xf32>
    %cst_19 = arith.constant dense<0.000000e+00> : vector<4x16xf32>
    %65 = tpu.matmul %63, %64, %cst_19 {dimension_numbers = #tpu.dot_dimension_numbers<[1], [1], [0], [0], [0, 0, 1, 0], [], []>} : vector<4x128xf32>, vector<16x128xf32>, vector<4x16xf32> -> vector<4x16xf32>
    %66 = arith.addf %62, %65 : vector<4x16xf32>
    %67 = vector.extract_strided_slice %61 {offsets = [4, 0], sizes = [4, 128], strides = [1, 1]} : vector<16x128xf32> to vector<4x128xf32>
    %68 = vector.extract_strided_slice %60 {offsets = [16, 0], sizes = [16, 128], strides = [1, 1]} : vector<64x128xf32> to vector<16x128xf32>
    %cst_20 = arith.constant dense<0.000000e+00> : vector<4x16xf32>
    %69 = tpu.matmul %67, %68, %cst_20 {dimension_numbers = #tpu.dot_dimension_numbers<[1], [1], [0], [0], [0, 0, 1, 0], [], []>} : vector<4x128xf32>, vector<16x128xf32>, vector<4x16xf32> -> vector<4x16xf32>
    %70 = arith.addf %66, %69 : vector<4x16xf32>
    %71 = vector.extract_strided_slice %61 {offsets = [8, 0], sizes = [4, 128], strides = [1, 1]} : vector<16x128xf32> to vector<4x128xf32>
    %72 = vector.extract_strided_slice %60 {offsets = [32, 0], sizes = [16, 128], strides = [1, 1]} : vector<64x128xf32> to vector<16x128xf32>
    %cst_21 = arith.constant dense<0.000000e+00> : vector<4x16xf32>
    %73 = tpu.matmul %71, %72, %cst_21 {dimension_numbers = #tpu.dot_dimension_numbers<[1], [1], [0], [0], [0, 0, 1, 0], [], []>} : vector<4x128xf32>, vector<16x128xf32>, vector<4x16xf32> -> vector<4x16xf32>
    %74 = arith.addf %70, %73 : vector<4x16xf32>
    %75 = vector.extract_strided_slice %61 {offsets = [12, 0], sizes = [4, 128], strides = [1, 1]} : vector<16x128xf32> to vector<4x128xf32>
    %76 = vector.extract_strided_slice %60 {offsets = [48, 0], sizes = [16, 128], strides = [1, 1]} : vector<64x128xf32> to vector<16x128xf32>
    %cst_22 = arith.constant dense<0.000000e+00> : vector<4x16xf32>
    %77 = tpu.matmul %75, %76, %cst_22 {dimension_numbers = #tpu.dot_dimension_numbers<[1], [1], [0], [0], [0, 0, 1, 0], [], []>} : vector<4x128xf32>, vector<16x128xf32>, vector<4x16xf32> -> vector<4x16xf32>
    %78 = arith.addf %74, %77 : vector<4x16xf32>
    %c3_i32 = arith.constant 3 : i32
    %79 = tpu.dynamic_rotate %25 by %c3_i32 dim 1 : vector<16x256xf32>, i32 -> vector<16x256xf32>
    %80 = vector.extract_strided_slice %2 {offsets = [0, 0], sizes = [1, 256], strides = [1, 1]} : vector<7x256xf32> to vector<1x256xf32>
    %81 = vector.broadcast %80 : vector<1x256xf32> to vector<16x256xf32>
    %82 = arith.mulf %79, %81 : vector<16x256xf32>
    %c2_i32 = arith.constant 2 : i32
    %83 = tpu.dynamic_rotate %25 by %c2_i32 dim 1 : vector<16x256xf32>, i32 -> vector<16x256xf32>
    %84 = vector.extract_strided_slice %2 {offsets = [1, 0], sizes = [1, 256], strides = [1, 1]} : vector<7x256xf32> to vector<1x256xf32>
    %85 = vector.broadcast %84 : vector<1x256xf32> to vector<16x256xf32>
    %86 = arith.mulf %83, %85 : vector<16x256xf32>
    %c1_i32 = arith.constant 1 : i32
    %87 = tpu.dynamic_rotate %25 by %c1_i32 dim 1 : vector<16x256xf32>, i32 -> vector<16x256xf32>
    %88 = vector.extract_strided_slice %2 {offsets = [2, 0], sizes = [1, 256], strides = [1, 1]} : vector<7x256xf32> to vector<1x256xf32>
    %89 = vector.broadcast %88 : vector<1x256xf32> to vector<16x256xf32>
    %90 = arith.mulf %87, %89 : vector<16x256xf32>
    %c255_i32 = arith.constant 255 : i32
    %91 = tpu.dynamic_rotate %25 by %c255_i32 dim 1 : vector<16x256xf32>, i32 -> vector<16x256xf32>
    %92 = vector.extract_strided_slice %2 {offsets = [4, 0], sizes = [1, 256], strides = [1, 1]} : vector<7x256xf32> to vector<1x256xf32>
    %93 = vector.broadcast %92 : vector<1x256xf32> to vector<16x256xf32>
    %94 = arith.mulf %91, %93 : vector<16x256xf32>
    %c254_i32 = arith.constant 254 : i32
    %95 = tpu.dynamic_rotate %25 by %c254_i32 dim 1 : vector<16x256xf32>, i32 -> vector<16x256xf32>
    %96 = vector.extract_strided_slice %2 {offsets = [5, 0], sizes = [1, 256], strides = [1, 1]} : vector<7x256xf32> to vector<1x256xf32>
    %97 = vector.broadcast %96 : vector<1x256xf32> to vector<16x256xf32>
    %98 = arith.mulf %95, %97 : vector<16x256xf32>
    %c253_i32 = arith.constant 253 : i32
    %99 = tpu.dynamic_rotate %25 by %c253_i32 dim 1 : vector<16x256xf32>, i32 -> vector<16x256xf32>
    %100 = vector.extract_strided_slice %2 {offsets = [6, 0], sizes = [1, 256], strides = [1, 1]} : vector<7x256xf32> to vector<1x256xf32>
    %101 = vector.broadcast %100 : vector<1x256xf32> to vector<16x256xf32>
    %102 = arith.mulf %99, %101 : vector<16x256xf32>
    %103 = tpu.concatenate %82, %86, %90, %25, %94, %98, %102 in 0 : vector<16x256xf32>, vector<16x256xf32>, vector<16x256xf32>, vector<16x256xf32>, vector<16x256xf32>, vector<16x256xf32>, vector<16x256xf32> -> vector<112x256xf32>
    %c0_23 = arith.constant 0 : index
    %c0_24 = arith.constant 0 : index
    %104 = vector.load %arg3[%c0_23, %c0_24] : memref<64x112xf32, #tpu.memory_space<vmem>>, vector<64x112xf32>
    %cst_25 = arith.constant dense<0.000000e+00> : vector<64x256xf32>
    %105 = tpu.matmul %104, %103, %cst_25 {dimension_numbers = #tpu.dot_dimension_numbers<[1], [0], [0], [1], [0, 0, 1, 1], [], []>} : vector<64x112xf32>, vector<112x256xf32>, vector<64x256xf32> -> vector<64x256xf32>
    %106 = vector.shape_cast %105 : vector<64x256xf32> to vector<4x16x256xf32>
    %107 = vector.shape_cast %54 : vector<4x16xf32> to vector<4x16x1xf32>
    %108 = vector.shape_cast %107 : vector<4x16x1xf32> to vector<4x16x1xf32>
    %109 = vector.broadcast %108 : vector<4x16x1xf32> to vector<4x16x128xf32>
    %110 = vector.shape_cast %78 : vector<4x16xf32> to vector<4x16x1xf32>
    %111 = vector.shape_cast %110 : vector<4x16x1xf32> to vector<4x16x1xf32>
    %112 = vector.broadcast %111 : vector<4x16x1xf32> to vector<4x16x128xf32>
    %113 = tpu.concatenate %109, %112 in 2 : vector<4x16x128xf32>, vector<4x16x128xf32> -> vector<4x16x256xf32>
    %114 = arith.addf %106, %113 : vector<4x16x256xf32>
    %115 = vector.extract_strided_slice %23 {offsets = [0, 0], sizes = [16, 256], strides = [1, 1]} : vector<64x256xf32> to vector<16x256xf32>
    %116 = vector.shape_cast %115 : vector<16x256xf32> to vector<1x16x256xf32>
    %117 = vector.broadcast %116 : vector<1x16x256xf32> to vector<4x16x256xf32>
    %118 = arith.mulf %114, %117 : vector<4x16x256xf32>
    %cst_26 = arith.constant dense<0.000000e+00> : vector<4x256xf32>
    %119 = vector.multi_reduction <add>, %118, %cst_26 [1] : vector<4x16x256xf32> to vector<4x256xf32>
    %120 = vector.extract_strided_slice %23 {offsets = [16, 0], sizes = [16, 256], strides = [1, 1]} : vector<64x256xf32> to vector<16x256xf32>
    %121 = vector.shape_cast %120 : vector<16x256xf32> to vector<1x16x256xf32>
    %122 = vector.broadcast %121 : vector<1x16x256xf32> to vector<4x16x256xf32>
    %123 = arith.mulf %114, %122 : vector<4x16x256xf32>
    %cst_27 = arith.constant dense<0.000000e+00> : vector<4x256xf32>
    %124 = vector.multi_reduction <add>, %123, %cst_27 [1] : vector<4x16x256xf32> to vector<4x256xf32>
    %125 = vector.extract_strided_slice %23 {offsets = [32, 0], sizes = [16, 256], strides = [1, 1]} : vector<64x256xf32> to vector<16x256xf32>
    %126 = vector.shape_cast %125 : vector<16x256xf32> to vector<1x16x256xf32>
    %127 = vector.broadcast %126 : vector<1x16x256xf32> to vector<4x16x256xf32>
    %128 = arith.mulf %114, %127 : vector<4x16x256xf32>
    %cst_28 = arith.constant dense<0.000000e+00> : vector<4x256xf32>
    %129 = vector.multi_reduction <add>, %128, %cst_28 [1] : vector<4x16x256xf32> to vector<4x256xf32>
    %130 = vector.extract_strided_slice %23 {offsets = [48, 0], sizes = [16, 256], strides = [1, 1]} : vector<64x256xf32> to vector<16x256xf32>
    %131 = vector.shape_cast %130 : vector<16x256xf32> to vector<1x16x256xf32>
    %132 = vector.broadcast %131 : vector<1x16x256xf32> to vector<4x16x256xf32>
    %133 = arith.mulf %114, %132 : vector<4x16x256xf32>
    %cst_29 = arith.constant dense<0.000000e+00> : vector<4x256xf32>
    %134 = vector.multi_reduction <add>, %133, %cst_29 [1] : vector<4x16x256xf32> to vector<4x256xf32>
    %135 = tpu.concatenate %119, %124, %129, %134 in 0 : vector<4x256xf32>, vector<4x256xf32>, vector<4x256xf32>, vector<4x256xf32> -> vector<16x256xf32>
    %c1_i32_30 = arith.constant 1 : i32
    %136 = tpu.dynamic_rotate %135 by %c1_i32_30 dim 1 : vector<16x256xf32>, i32 -> vector<16x256xf32>
    %137 = vector.extract_strided_slice %2 {offsets = [2, 0], sizes = [1, 256], strides = [1, 1]} : vector<7x256xf32> to vector<1x256xf32>
    %138 = vector.broadcast %137 : vector<1x256xf32> to vector<16x256xf32>
    %139 = arith.mulf %136, %138 : vector<16x256xf32>
    %140 = arith.addf %139, %135 : vector<16x256xf32>
    %c255_i32_31 = arith.constant 255 : i32
    %141 = tpu.dynamic_rotate %135 by %c255_i32_31 dim 1 : vector<16x256xf32>, i32 -> vector<16x256xf32>
    %142 = vector.extract_strided_slice %2 {offsets = [4, 0], sizes = [1, 256], strides = [1, 1]} : vector<7x256xf32> to vector<1x256xf32>
    %143 = vector.broadcast %142 : vector<1x256xf32> to vector<16x256xf32>
    %144 = arith.mulf %141, %143 : vector<16x256xf32>
    %145 = arith.addf %140, %144 : vector<16x256xf32>
    %cst_32 = arith.constant 0.333333343 : f32
    %146 = vector.broadcast %cst_32 : f32 to vector<16x256xf32>
    %147 = arith.mulf %145, %146 : vector<16x256xf32>
    %148 = vector.extract_strided_slice %1 {offsets = [224, 0], sizes = [16, 1], strides = [1, 1]} : vector<320x1xf32> to vector<16x1xf32>
    %149 = vector.broadcast %148 : vector<16x1xf32> to vector<16x256xf32>
    %150 = arith.mulf %147, %149 : vector<16x256xf32>
    %151 = vector.extract_strided_slice %1 {offsets = [240, 0], sizes = [16, 1], strides = [1, 1]} : vector<320x1xf32> to vector<16x1xf32>
    %152 = vector.broadcast %151 : vector<16x1xf32> to vector<16x256xf32>
    %153 = arith.addf %150, %152 : vector<16x256xf32>
    %cst_33 = arith.constant 0.000000e+00 : f32
    %154 = vector.broadcast %cst_33 : f32 to vector<16x256xf32>
    %155 = arith.maximumf %153, %154 : vector<16x256xf32>
    %156 = vector.extract_strided_slice %0 {offsets = [224, 0], sizes = [64, 16], strides = [1, 1]} : vector<288x16xf32> to vector<64x16xf32>
    %cst_34 = arith.constant dense<0.000000e+00> : vector<64x256xf32>
    %157 = tpu.matmul %156, %155, %cst_34 {dimension_numbers = #tpu.dot_dimension_numbers<[1], [0], [0], [1], [0, 0, 1, 1], [], []>} : vector<64x16xf32>, vector<16x256xf32>, vector<64x256xf32> -> vector<64x256xf32>
    %158 = vector.extract_strided_slice %1 {offsets = [256, 0], sizes = [64, 1], strides = [1, 1]} : vector<320x1xf32> to vector<64x1xf32>
    %159 = vector.broadcast %158 : vector<64x1xf32> to vector<64x256xf32>
    %160 = arith.addf %157, %159 : vector<64x256xf32>
    %161 = arith.addf %160, %17 : vector<64x256xf32>
    %cst_35 = arith.constant 0.000000e+00 : f32
    %162 = vector.broadcast %cst_35 : f32 to vector<64x256xf32>
    %163 = arith.maximumf %161, %162 : vector<64x256xf32>
    %164 = vector.extract_strided_slice %163 {offsets = [0, 0], sizes = [64, 128], strides = [1, 1]} : vector<64x256xf32> to vector<64x128xf32>
    %c0_36 = arith.constant 0 : index
    %c0_37 = arith.constant 0 : index
    %c0_38 = arith.constant 0 : index
    %165 = vector.load %arg6[%c0_36, %c0_37, %c0_38] : memref<2x64x128xf32, #tpu.memory_space<vmem>>, vector<1x64x128xf32>
    %166 = vector.shape_cast %165 : vector<1x64x128xf32> to vector<64x128xf32>
    %167 = vector.shape_cast %164 : vector<64x128xf32> to vector<1x64x128xf32>
    tpu.vector_store %arg6[%c0_36, %c0_37, %c0_38], %167 {strides = array<i32>} : memref<2x64x128xf32, #tpu.memory_space<vmem>>, vector<1x64x128xf32>,
    %168 = vector.extract_strided_slice %163 {offsets = [0, 128], sizes = [64, 128], strides = [1, 1]} : vector<64x256xf32> to vector<64x128xf32>
    %c1 = arith.constant 1 : index
    %c0_39 = arith.constant 0 : index
    %c0_40 = arith.constant 0 : index
    %169 = vector.load %arg6[%c1, %c0_39, %c0_40] : memref<2x64x128xf32, #tpu.memory_space<vmem>>, vector<1x64x128xf32>
    %170 = vector.shape_cast %169 : vector<1x64x128xf32> to vector<64x128xf32>
    %171 = vector.shape_cast %168 : vector<64x128xf32> to vector<1x64x128xf32>
    tpu.vector_store %arg6[%c1, %c0_39, %c0_40], %171 {strides = array<i32>} : memref<2x64x128xf32, #tpu.memory_space<vmem>>, vector<1x64x128xf32>,
    return
  }
  func.func @transform_0(%arg0: i32) -> (i32, i32, i32) {
    %c0_i32 = arith.constant 0 : i32
    %c0_i32_0 = arith.constant 0 : i32
    %c0_i32_1 = arith.constant 0 : i32
    %c0_i32_2 = arith.constant 0 : i32
    return %c0_i32, %c0_i32_0, %c0_i32_1 : i32, i32, i32
  }
  func.func @transform_1(%arg0: i32) -> (i32, i32) {
    %c0_i32 = arith.constant 0 : i32
    %c0_i32_0 = arith.constant 0 : i32
    %c0_i32_1 = arith.constant 0 : i32
    return %c0_i32, %c0_i32_0 : i32, i32
  }
  func.func @transform_2(%arg0: i32) -> (i32, i32) {
    %c0_i32 = arith.constant 0 : i32
    %c0_i32_0 = arith.constant 0 : i32
    %c0_i32_1 = arith.constant 0 : i32
    return %c0_i32, %c0_i32_0 : i32, i32
  }
  func.func @transform_3(%arg0: i32) -> (i32, i32) {
    %c0_i32 = arith.constant 0 : i32
    %c0_i32_0 = arith.constant 0 : i32
    %c0_i32_1 = arith.constant 0 : i32
    return %c0_i32, %c0_i32_0 : i32, i32
  }
  func.func @transform_4(%arg0: i32) -> (i32, i32) {
    %c0_i32 = arith.constant 0 : i32
    %c0_i32_0 = arith.constant 0 : i32
    %c0_i32_1 = arith.constant 0 : i32
    return %c0_i32, %c0_i32_0 : i32, i32
  }
  func.func @transform_5(%arg0: i32) -> (i32, i32, i32) {
    %c0_i32 = arith.constant 0 : i32
    %c0_i32_0 = arith.constant 0 : i32
    %c0_i32_1 = arith.constant 0 : i32
    %c0_i32_2 = arith.constant 0 : i32
    return %c0_i32, %c0_i32_0, %c0_i32_1 : i32, i32, i32
  }
}

</mosaic_0001>

<llo_original>
// kernel: tpu_custom_call.1
$region0: #{tpu_custom_call.1}
  #allocation0 [shape = 'u32[]', space=smem, size = 0x4, offset = 0x4, fixed_abs, tag = 'smem constant byte address 0x4 - core index']
  #allocation1 [shape = 'u32[144,128]{1,0:T(1,128)}', space=vmem, size = 0x12000, scoped, tag = 'internal scratch']
  %s0 = inlined_call_operand.vmem [shape: f32[2,16,128], index: 0, kind: input, shape index: {}]
  %s1 = inlined_call_operand.vmem [shape: f32[288,16], index: 1, kind: input, shape index: {}]
  %s2 = inlined_call_operand.vmem [shape: f32[64,112], index: 2, kind: input, shape index: {}]
  %s3 = inlined_call_operand.vmem [shape: f32[320,1], index: 3, kind: input, shape index: {}]
  %s4 = inlined_call_operand.vmem [shape: f32[7,256], index: 4, kind: input, shape index: {}]
  %s5 = inlined_call_operand.hbm [shape: f32[2,64,128], index: 5, kind: output, shape index: {}]
  %s6 = sld [smem:[#allocation0]]
  $region30: #{tpu_custom_call.1} parent=0
    _
  %s8 = ssub.s32 1, %s6
  %s9 = scalar_select 0, %s8, %s6
  $region1: #{tpu_custom_call.1} parent=0
    #allocation2 [shape = 'u8[65536]{0}', space=vmem, size = 0x10000, scoped, tag = 'output window, operand 0, single buffered']
    #allocation3 [shape = 's32[1]{0}', space=sflag, size = 0x4, scoped, tag = 'scoped memory for tpu_custom_call.1']
    %10 = vsyncpa [#allocation3], 0
    // Predicated region
    $region2: #{tpu_custom_call.1} parent=1 // pred_check
      _
    $region3: #{tpu_custom_call.1} parent=1 // pred_check_branch
      %12 = sbr.rel (0) target = $region5
    $region4: #{tpu_custom_call.1} parent=1 // pred_region
      _
    $region5: #{tpu_custom_call.1} parent=1 // pred_fallthru
      _
    // Predicated region
    $region6: #{tpu_custom_call.1} parent=1 // pred_check
      _
    $region7: #{tpu_custom_call.1} parent=1 // pred_check_branch
      %14 = sbr.rel (0) target = $region9
    $region8: #{tpu_custom_call.1} parent=1 // pred_region
      _
    $region9: #{tpu_custom_call.1} parent=1 // pred_fallthru
      _
    // Predicated region
    $region10: #{tpu_custom_call.1} parent=1 // pred_check
      _
    $region11: #{tpu_custom_call.1} parent=1 // pred_check_branch
      %16 = sbr.rel (0) target = $region13
    $region12: #{tpu_custom_call.1} parent=1 // pred_region
      _
    $region13: #{tpu_custom_call.1} parent=1 // pred_fallthru
      _
    // Predicated region
    $region14: #{tpu_custom_call.1} parent=1 // pred_check
      _
    $region15: #{tpu_custom_call.1} parent=1 // pred_check_branch
      %18 = sbr.rel (0) target = $region17
    $region16: #{tpu_custom_call.1} parent=1 // pred_region
      _
    $region17: #{tpu_custom_call.1} parent=1 // pred_fallthru
      _
    // Predicated region
    $region18: #{tpu_custom_call.1} parent=1 // pred_check
      _
    $region19: #{tpu_custom_call.1} parent=1 // pred_check_branch
      %20 = sbr.rel (0) target = $region21
    $region20: #{tpu_custom_call.1} parent=1 // pred_region
      _
    $region21: #{tpu_custom_call.1} parent=1 // pred_fallthru
      _
    %v21 = vld [vmem:[%s1] sm:$0xff]
    %v22 = vld [vmem:[%s1 + $0x8] sm:$0xff]
    %v23 = vld [vmem:[%s1 + $0x10] sm:$0xff]
    %v24 = vld [vmem:[%s1 + $0x18] sm:$0xff]
    %v25 = vld [vmem:[%s1 + $0x20] sm:$0xff]
    %v26 = vld [vmem:[%s1 + $0x28] sm:$0xff]
    %v27 = vld [vmem:[%s1 + $0x30] sm:$0xff]
    %v28 = vld [vmem:[%s1 + $0x38] sm:$0xff]
    %v29 = vld [vmem:[%s1 + $0x40] sm:$0xff]
    %v30 = vld [vmem:[%s1 + $0x48] sm:$0xff]
    %v31 = vld [vmem:[%s1 + $0x50] sm:$0xff]
    %v32 = vld [vmem:[%s1 + $0x58] sm:$0xff]
    %v33 = vld [vmem:[%s1 + $0x60] sm:$0xff]
    %v34 = vld [vmem:[%s1 + $0x68] sm:$0xff]
    %v35 = vld [vmem:[%s1 + $0x70] sm:$0xff]
    %v36 = vld [vmem:[%s1 + $0x78] sm:$0xff]
    %v37 = vld [vmem:[%s1 + $0x80] sm:$0xff]
    %v38 = vld [vmem:[%s1 + $0x88] sm:$0xff]
    %v39 = vld [vmem:[%s1 + $0x90] sm:$0xff]
    %v40 = vld [vmem:[%s1 + $0x98] sm:$0xff]
    %v41 = vld [vmem:[%s1 + $0xa0] sm:$0xff]
    %v42 = vld [vmem:[%s1 + $0xa8] sm:$0xff]
    %v43 = vld [vmem:[%s1 + $0xb0] sm:$0xff]
    %v44 = vld [vmem:[%s1 + $0xb8] sm:$0xff]
    %v45 = vld [vmem:[%s1 + $0xc0] sm:$0xff]
    %v46 = vld [vmem:[%s1 + $0xc8] sm:$0xff]
    %v47 = vld [vmem:[%s1 + $0xd0] sm:$0xff]
    %v48 = vld [vmem:[%s1 + $0xd8] sm:$0xff]
    %v49 = vld [vmem:[%s1 + $0xe0] sm:$0xff]
    %v50 = vld [vmem:[%s1 + $0xe8] sm:$0xff]
    %v51 = vld [vmem:[%s1 + $0xf0] sm:$0xff]
    %v52 = vld [vmem:[%s1 + $0xf8] sm:$0xff]
    %v53 = vld [vmem:[%s1 + $0x100] sm:$0xff]
    %v54 = vld [vmem:[%s1 + $0x108] sm:$0xff]
    %v55 = vld [vmem:[%s1 + $0x110] sm:$0xff]
    %v56 = vld [vmem:[%s1 + $0x118] sm:$0xff]
    %v57 = vld [vmem:[%s3] sm:$0xff]
    %v58 = vld [vmem:[%s3 + $0x8] sm:$0xff]
    %v59 = vld [vmem:[%s3 + $0x10] sm:$0xff]
    %v60 = vld [vmem:[%s3 + $0x18] sm:$0xff]
    %v61 = vld [vmem:[%s3 + $0x20] sm:$0xff]
    %v62 = vld [vmem:[%s3 + $0x28] sm:$0xff]
    %v63 = vld [vmem:[%s3 + $0x30] sm:$0xff]
    %v64 = vld [vmem:[%s3 + $0x38] sm:$0xff]
    %v65 = vld [vmem:[%s3 + $0x40] sm:$0xff]
    %v66 = vld [vmem:[%s3 + $0x48] sm:$0xff]
    %v67 = vld [vmem:[%s3 + $0x50] sm:$0xff]
    %v68 = vld [vmem:[%s3 + $0x58] sm:$0xff]
    %v69 = vld [vmem:[%s3 + $0x60] sm:$0xff]
    %v70 = vld [vmem:[%s3 + $0x68] sm:$0xff]
    %v71 = vld [vmem:[%s3 + $0x70] sm:$0xff]
    %v72 = vld [vmem:[%s3 + $0x78] sm:$0xff]
    %v73 = vld [vmem:[%s3 + $0x80] sm:$0xff]
    %v74 = vld [vmem:[%s3 + $0x88] sm:$0xff]
    %v75 = vld [vmem:[%s3 + $0x90] sm:$0xff]
    %v76 = vld [vmem:[%s3 + $0x98] sm:$0xff]
    %v77 = vld [vmem:[%s3 + $0xa0] sm:$0xff]
    %v78 = vld [vmem:[%s3 + $0xa8] sm:$0xff]
    %v79 = vld [vmem:[%s3 + $0xb0] sm:$0xff]
    %v80 = vld [vmem:[%s3 + $0xb8] sm:$0xff]
    %v81 = vld [vmem:[%s3 + $0xc0] sm:$0xff]
    %v82 = vld [vmem:[%s3 + $0xc8] sm:$0xff]
    %v83 = vld [vmem:[%s3 + $0xd0] sm:$0xff]
    %v84 = vld [vmem:[%s3 + $0xd8] sm:$0xff]
    %v85 = vld [vmem:[%s3 + $0xe0] sm:$0xff]
    %v86 = vld [vmem:[%s3 + $0xe8] sm:$0xff]
    %v87 = vld [vmem:[%s3 + $0xf0] sm:$0xff]
    %v88 = vld [vmem:[%s3 + $0xf8] sm:$0xff]
    %v89 = vld [vmem:[%s3 + $0x100] sm:$0xff]
    %v90 = vld [vmem:[%s3 + $0x108] sm:$0xff]
    %v91 = vld [vmem:[%s3 + $0x110] sm:$0xff]
    %v92 = vld [vmem:[%s3 + $0x118] sm:$0xff]
    %v93 = vld [vmem:[%s3 + $0x120] sm:$0xff]
    %v94 = vld [vmem:[%s3 + $0x128] sm:$0xff]
    %v95 = vld [vmem:[%s3 + $0x130] sm:$0xff]
    %v96 = vld [vmem:[%s3 + $0x138] sm:$0xff]
    %v97 = vld [vmem:[%s4] sm:$0x7f]
    %v98 = vld [vmem:[%s4 + $0x8] sm:$0x7f]
    %v99 = vld [vmem:[%s0] sm:$0xff]
    %v100 = vld [vmem:[%s0 + $0x8] sm:$0xff]
    %v101 = vld [vmem:[%s0 + $0x10] sm:$0xff]
    %v102 = vld [vmem:[%s0 + $0x18] sm:$0xff]
    %104 = vset.pattern.permute.xlu0 0
    %105 = vperm.xlu0 %104, %v57
    %v106 = vpop.permute.xlu0 %105
    %109 = vset.pattern.permute.xlu0 0
    %110 = vperm.xlu0 %109, %v58
    %v111 = vpop.permute.xlu0 %110
    %114 = vset.pattern.permute.xlu0 0
    %115 = vperm.xlu0 %114, %v59
    %v116 = vpop.permute.xlu0 %115
    %119 = vset.pattern.permute.xlu0 0
    %120 = vperm.xlu0 %119, %v60
    %v121 = vpop.permute.xlu0 %120
    %124 = vset.pattern.permute.xlu0 0
    %125 = vperm.xlu0 %124, %v61
    %v126 = vpop.permute.xlu0 %125
    %129 = vset.pattern.permute.xlu0 0
    %130 = vperm.xlu0 %129, %v62
    %v131 = vpop.permute.xlu0 %130
    %134 = vset.pattern.permute.xlu0 0
    %135 = vperm.xlu0 %134, %v63
    %v136 = vpop.permute.xlu0 %135
    %139 = vset.pattern.permute.xlu0 0
    %140 = vperm.xlu0 %139, %v64
    %v141 = vpop.permute.xlu0 %140
    %144 = vset.pattern.permute.xlu0 0
    %145 = vperm.xlu0 %144, %v65
    %v146 = vpop.permute.xlu0 %145
    %149 = vset.pattern.permute.xlu0 0
    %150 = vperm.xlu0 %149, %v66
    %v151 = vpop.permute.xlu0 %150
    %vm153 = vcmask 130048
    %v155 = vsel %vm153, %v21, 0
    %v158 = vsel %vm153, %v22, 0
    %v161 = vsel %vm153, %v23, 0
    %v164 = vsel %vm153, %v24, 0
    %v167 = vsel %vm153, %v25, 0
    %v170 = vsel %vm153, %v26, 0
    %v173 = vsel %vm153, %v27, 0
    %v176 = vsel %vm153, %v28, 0
    %v179 = vsel %vm153, %v29, 0
    %v182 = vsel %vm153, %v30, 0
    %184 = vmatprep.subr.mxu0 0.0
    %185 = vmatpush1.msra.mxu0 0.0
    %186 = vmatprep.subr.mxu0 0.0
    %187 = vmatpush1.msra.mxu0 0.0
    %188 = vmatprep.subr.mxu0 0.0
    %189 = vmatpush1.msra.mxu0 0.0
    %190 = vmatprep.subr.mxu0 0.0
    %191 = vmatpush1.msra.mxu0 0.0
    %192 = vmatprep.subr.mxu0 0.0
    %193 = vmatpush1.msra.mxu0 0.0
    %194 = vmatprep.subr.mxu0 0.0
    %195 = vmatpush1.msra.mxu0 0.0
    %196 = vmatprep.subr.mxu0 0.0
    %197 = vmatpush1.msra.mxu0 0.0
    %198 = vmatprep.subr.mxu0 0.0
    %199 = vmatpush1.msra.mxu0 0.0
    %200 = vmatprep.subr.mxu0 0.0
    %201 = vmatpush1.msra.mxu0 0.0
    %202 = vmatprep.subr.mxu0 0.0
    %203 = vmatpush1.msra.mxu0 0.0
    %204 = vmatprep.subr.mxu0 0.0
    %205 = vmatpush1.msra.mxu0 0.0
    %206 = vmatprep.subr.mxu0 0.0
    %207 = vmatpush1.msra.mxu0 0.0
    %208 = vmatprep.subr.mxu0 0.0
    %209 = vmatpush1.msra.mxu0 0.0
    %210 = vmatprep.subr.mxu0 0.0
    %211 = vmatpush1.msra.mxu0 0.0
    %212 = vmatprep.subr.mxu0 %v102
    %213 = vmatpush1.msra.mxu0 %v100
    %214 = vmatprep.subr.mxu0 %v101
    %215 = vmatpush1.msra.mxu0 %v99
    %216 = vmatprep.subr.mxu0 0.0
    %217 = vmatpush2.msra.mxu0 0.0
    %218 = vmatprep.subr.mxu0 0.0
    %219 = vmatpush2.msra.mxu0 0.0
    %220 = vmatprep.subr.mxu0 0.0
    %221 = vmatpush2.msra.mxu0 0.0
    %222 = vmatprep.subr.mxu0 0.0
    %223 = vmatpush2.msra.mxu0 0.0
    %224 = vmatprep.subr.mxu0 0.0
    %225 = vmatpush2.msra.mxu0 0.0
    %226 = vmatprep.subr.mxu0 0.0
    %227 = vmatpush2.msra.mxu0 0.0
    %228 = vmatprep.subr.mxu0 0.0
    %229 = vmatpush2.msra.mxu0 0.0
    %230 = vmatprep.subr.mxu0 0.0
    %231 = vmatpush2.msra.mxu0 0.0
    %232 = vmatprep.subr.mxu0 0.0
    %233 = vmatpush2.msra.mxu0 0.0
    %234 = vmatprep.subr.mxu0 0.0
    %235 = vmatpush2.msra.mxu0 0.0
    %236 = vmatprep.subr.mxu0 0.0
    %237 = vmatpush2.msra.mxu0 0.0
    %238 = vmatprep.subr.mxu0 0.0
    %239 = vmatpush2.msra.mxu0 0.0
    %240 = vmatprep.subr.mxu0 0.0
    %241 = vmatpush2.msra.mxu0 0.0
    %242 = vmatprep.subr.mxu0 0.0
    %243 = vmatpush2.msra.mxu0 0.0
    %244 = vmatprep.subr.mxu0 0.0
    %245 = vmatpush2.msra.mxu0 0.0
    %246 = vmatprep.subr.mxu0 0.0
    %247 = vmatpush2.msra.mxu0 0.0
    %248 = vmatprep.mubr.f32.mxu0 0.0
    %249 = vmatmul.mubr.f32.gmra.mxu0 %v155
    %v250 = vpop.f32.mrf.mxu0
    %v251 = vadd.f32 %v106, %v250
    %v252 = vpop.f32.mrf.mxu0
    %v253 = vadd.f32 %v106, %v252
    %254 = vmatprep.mubr.f32.mxu0 0.0
    %255 = vmatmul.mubr.f32.gmra.mxu0 %v158
    %v256 = vpop.f32.mrf.mxu0
    %v257 = vadd.f32 %v111, %v256
    %v258 = vpop.f32.mrf.mxu0
    %v259 = vadd.f32 %v111, %v258
    %260 = vmatprep.mubr.f32.mxu0 0.0
    %261 = vmatmul.mubr.f32.gmra.mxu0 %v161
    %v262 = vpop.f32.mrf.mxu0
    %v263 = vadd.f32 %v116, %v262
    %v264 = vpop.f32.mrf.mxu0
    %v265 = vadd.f32 %v116, %v264
    %266 = vmatprep.mubr.f32.mxu0 0.0
    %267 = vmatmul.mubr.f32.gmra.mxu0 %v164
    %v268 = vpop.f32.mrf.mxu0
    %v269 = vadd.f32 %v121, %v268
    %v270 = vpop.f32.mrf.mxu0
    %v271 = vadd.f32 %v121, %v270
    %272 = vmatprep.mubr.f32.mxu0 0.0
    %273 = vmatmul.mubr.f32.gmra.mxu0 %v167
    %v274 = vpop.f32.mrf.mxu0
    %v275 = vadd.f32 %v126, %v274
    %v276 = vpop.f32.mrf.mxu0
    %v277 = vadd.f32 %v126, %v276
    %278 = vmatprep.mubr.f32.mxu0 0.0
    %279 = vmatmul.mubr.f32.gmra.mxu0 %v170
    %v280 = vpop.f32.mrf.mxu0
    %v281 = vadd.f32 %v131, %v280
    %v282 = vpop.f32.mrf.mxu0
    %v283 = vadd.f32 %v131, %v282
    %284 = vmatprep.mubr.f32.mxu0 0.0
    %285 = vmatmul.mubr.f32.gmra.mxu0 %v173
    %v286 = vpop.f32.mrf.mxu0
    %v287 = vadd.f32 %v136, %v286
    %v288 = vpop.f32.mrf.mxu0
    %v289 = vadd.f32 %v136, %v288
    %290 = vmatprep.mubr.f32.mxu0 0.0
    %291 = vmatmul.mubr.f32.gmra.mxu0 %v176
    %v292 = vpop.f32.mrf.mxu0
    %v293 = vadd.f32 %v141, %v292
    %v294 = vpop.f32.mrf.mxu0
    %v295 = vadd.f32 %v141, %v294
    %296 = vmatprep.mubr.f32.mxu0 0.0
    %297 = vmatmul.mubr.f32.gmra.mxu0 %v179
    %v298 = vpop.f32.mrf.mxu0
    %v299 = vadd.f32 %v146, %v298
    %v300 = vpop.f32.mrf.mxu0
    %v301 = vadd.f32 %v146, %v300
    %302 = vmatprep.mubr.f32.mxu0 0.0
    %303 = vmatmul.mubr.f32.gmra.mxu0 %v182
    %v304 = vpop.f32.mrf.mxu0
    %v305 = vadd.f32 %v151, %v304
    %v306 = vpop.f32.mrf.mxu0
    %v307 = vadd.f32 %v151, %v306
    %308 = vdwg.mxu0
    %v309 = vmax.f32 %v251, 0.0
    %v310 = vmax.f32 %v253, 0.0
    %v311 = vmax.f32 %v257, 0.0
    %v312 = vmax.f32 %v259, 0.0
    %314 = vset.pattern.permute.xlu0 0
    %315 = vperm.xlu0 %314, %v67
    %v316 = vpop.permute.xlu0 %315
    %319 = vset.pattern.permute.xlu0 0
    %320 = vperm.xlu0 %319, %v68
    %v321 = vpop.permute.xlu0 %320
    %324 = vset.pattern.permute.xlu0 0
    %325 = vperm.xlu0 %324, %v69
    %v326 = vpop.permute.xlu0 %325
    %329 = vset.pattern.permute.xlu0 0
    %330 = vperm.xlu0 %329, %v70
    %v331 = vpop.permute.xlu0 %330
    %334 = vset.pattern.permute.xlu0 0
    %335 = vperm.xlu0 %334, %v71
    %v336 = vpop.permute.xlu0 %335
    %339 = vset.pattern.permute.xlu0 0
    %340 = vperm.xlu0 %339, %v72
    %v341 = vpop.permute.xlu0 %340
    %344 = vset.pattern.permute.xlu0 0
    %345 = vperm.xlu0 %344, %v73
    %v346 = vpop.permute.xlu0 %345
    %349 = vset.pattern.permute.xlu0 0
    %350 = vperm.xlu0 %349, %v74
    %v351 = vpop.permute.xlu0 %350
    %354 = vset.pattern.permute.xlu0 0
    %355 = vperm.xlu0 %354, %v75
    %v356 = vpop.permute.xlu0 %355
    %359 = vset.pattern.permute.xlu0 0
    %360 = vperm.xlu0 %359, %v76
    %v361 = vpop.permute.xlu0 %360
    %364 = vset.pattern.permute.xlu0 0
    %365 = vperm.xlu0 %364, %v77
    %v366 = vpop.permute.xlu0 %365
    %369 = vset.pattern.permute.xlu0 0
    %370 = vperm.xlu0 %369, %v78
    %v371 = vpop.permute.xlu0 %370
    %374 = vset.pattern.permute.xlu0 0
    %375 = vperm.xlu0 %374, %v79
    %v376 = vpop.permute.xlu0 %375
    %379 = vset.pattern.permute.xlu0 0
    %380 = vperm.xlu0 %379, %v80
    %v381 = vpop.permute.xlu0 %380
    %384 = vset.pattern.permute.xlu0 0
    %385 = vperm.xlu0 %384, %v81
    %v386 = vpop.permute.xlu0 %385
    %389 = vset.pattern.permute.xlu0 0
    %390 = vperm.xlu0 %389, %v82
    %v391 = vpop.permute.xlu0 %390
    %394 = vset.pattern.permute.xlu0 0
    %395 = vperm.xlu0 %394, %v83
    %v396 = vpop.permute.xlu0 %395
    %399 = vset.pattern.permute.xlu0 0
    %400 = vperm.xlu0 %399, %v84
    %v401 = vpop.permute.xlu0 %400
    %v404 = vsel %vm153, %v31, 0
    %v407 = vsel %vm153, %v32, 0
    %v410 = vsel %vm153, %v33, 0
    %v413 = vsel %vm153, %v34, 0
    %v416 = vsel %vm153, %v35, 0
    %v419 = vsel %vm153, %v36, 0
    %v422 = vsel %vm153, %v37, 0
    %v425 = vsel %vm153, %v38, 0
    %v428 = vsel %vm153, %v39, 0
    %v431 = vsel %vm153, %v40, 0
    %v434 = vsel %vm153, %v41, 0
    %v437 = vsel %vm153, %v42, 0
    %v440 = vsel %vm153, %v43, 0
    %v443 = vsel %vm153, %v44, 0
    %v446 = vsel %vm153, %v45, 0
    %v449 = vsel %vm153, %v46, 0
    %v452 = vsel %vm153, %v47, 0
    %v455 = vsel %vm153, %v48, 0
    %457 = vmatprep.subr.mxu0 0.0
    %458 = vmatpush1.msra.mxu0 0.0
    %459 = vmatprep.subr.mxu0 0.0
    %460 = vmatpush1.msra.mxu0 0.0
    %461 = vmatprep.subr.mxu0 0.0
    %462 = vmatpush1.msra.mxu0 0.0
    %463 = vmatprep.subr.mxu0 0.0
    %464 = vmatpush1.msra.mxu0 0.0
    %465 = vmatprep.subr.mxu0 0.0
    %466 = vmatpush1.msra.mxu0 0.0
    %467 = vmatprep.subr.mxu0 0.0
    %468 = vmatpush1.msra.mxu0 0.0
    %469 = vmatprep.subr.mxu0 0.0
    %470 = vmatpush1.msra.mxu0 0.0
    %471 = vmatprep.subr.mxu0 0.0
    %472 = vmatpush1.msra.mxu0 0.0
    %473 = vmatprep.subr.mxu0 0.0
    %474 = vmatpush1.msra.mxu0 0.0
    %475 = vmatprep.subr.mxu0 0.0
    %476 = vmatpush1.msra.mxu0 0.0
    %477 = vmatprep.subr.mxu0 0.0
    %478 = vmatpush1.msra.mxu0 0.0
    %479 = vmatprep.subr.mxu0 0.0
    %480 = vmatpush1.msra.mxu0 0.0
    %481 = vmatprep.subr.mxu0 0.0
    %482 = vmatpush1.msra.mxu0 0.0
    %483 = vmatprep.subr.mxu0 0.0
    %484 = vmatpush1.msra.mxu0 0.0
    %485 = vmatprep.subr.mxu0 %v312
    %486 = vmatpush1.msra.mxu0 %v311
    %487 = vmatprep.subr.mxu0 %v310
    %488 = vmatpush1.msra.mxu0 %v309
    %489 = vmatprep.subr.mxu0 0.0
    %490 = vmatpush2.msra.mxu0 0.0
    %491 = vmatprep.subr.mxu0 0.0
    %492 = vmatpush2.msra.mxu0 0.0
    %493 = vmatprep.subr.mxu0 0.0
    %494 = vmatpush2.msra.mxu0 0.0
    %495 = vmatprep.subr.mxu0 0.0
    %496 = vmatpush2.msra.mxu0 0.0
    %497 = vmatprep.subr.mxu0 0.0
    %498 = vmatpush2.msra.mxu0 0.0
    %499 = vmatprep.subr.mxu0 0.0
    %500 = vmatpush2.msra.mxu0 0.0
    %501 = vmatprep.subr.mxu0 0.0
    %502 = vmatpush2.msra.mxu0 0.0
    %503 = vmatprep.subr.mxu0 0.0
    %504 = vmatpush2.msra.mxu0 0.0
    %505 = vmatprep.subr.mxu0 0.0
    %506 = vmatpush2.msra.mxu0 0.0
    %507 = vmatprep.subr.mxu0 0.0
    %508 = vmatpush2.msra.mxu0 0.0
    %509 = vmatprep.subr.mxu0 0.0
    %510 = vmatpush2.msra.mxu0 0.0
    %511 = vmatprep.subr.mxu0 0.0
    %512 = vmatpush2.msra.mxu0 0.0
    %513 = vmatprep.subr.mxu0 0.0
    %514 = vmatpush2.msra.mxu0 0.0
    %515 = vmatprep.subr.mxu0 0.0
    %516 = vmatpush2.msra.mxu0 0.0
    %517 = vmatprep.subr.mxu0 0.0
    %518 = vmatpush2.msra.mxu0 0.0
    %519 = vmatprep.subr.mxu0 0.0
    %520 = vmatpush2.msra.mxu0 0.0
    %521 = vmatprep.mubr.f32.mxu0 0.0
    %522 = vmatmul.mubr.f32.gmra.mxu0 %v404
    %v523 = vpop.f32.mrf.mxu0
    %v524 = vadd.f32 %v316, %v523
    %v525 = vpop.f32.mrf.mxu0
    %v526 = vadd.f32 %v316, %v525
    %527 = vmatprep.mubr.f32.mxu0 0.0
    %528 = vmatmul.mubr.f32.gmra.mxu0 %v407
    %v529 = vpop.f32.mrf.mxu0
    %v530 = vadd.f32 %v321, %v529
    %v531 = vpop.f32.mrf.mxu0
    %v532 = vadd.f32 %v321, %v531
    %533 = vmatprep.mubr.f32.mxu0 0.0
    %534 = vmatmul.mubr.f32.gmra.mxu0 %v410
    %v535 = vpop.f32.mrf.mxu0
    %v536 = vadd.f32 %v326, %v535
    %v537 = vpop.f32.mrf.mxu0
    %v538 = vadd.f32 %v326, %v537
    %539 = vmatprep.mubr.f32.mxu0 0.0
    %540 = vmatmul.mubr.f32.gmra.mxu0 %v413
    %v541 = vpop.f32.mrf.mxu0
    %v542 = vadd.f32 %v331, %v541
    %v543 = vpop.f32.mrf.mxu0
    %v544 = vadd.f32 %v331, %v543
    %545 = vmatprep.mubr.f32.mxu0 0.0
    %546 = vmatmul.mubr.f32.gmra.mxu0 %v416
    %v547 = vpop.f32.mrf.mxu0
    %v548 = vadd.f32 %v336, %v547
    %v549 = vpop.f32.mrf.mxu0
    %v550 = vadd.f32 %v336, %v549
    %551 = vmatprep.mubr.f32.mxu0 0.0
    %552 = vmatmul.mubr.f32.gmra.mxu0 %v419
    %v553 = vpop.f32.mrf.mxu0
    %v554 = vadd.f32 %v341, %v553
    %v555 = vpop.f32.mrf.mxu0
    %v556 = vadd.f32 %v341, %v555
    %557 = vmatprep.mubr.f32.mxu0 0.0
    %558 = vmatmul.mubr.f32.gmra.mxu0 %v422
    %v559 = vpop.f32.mrf.mxu0
    %v560 = vadd.f32 %v346, %v559
    %v561 = vpop.f32.mrf.mxu0
    %v562 = vadd.f32 %v346, %v561
    %563 = vmatprep.mubr.f32.mxu0 0.0
    %564 = vmatmul.mubr.f32.gmra.mxu0 %v425
    %v565 = vpop.f32.mrf.mxu0
    %v566 = vadd.f32 %v351, %v565
    %v567 = vpop.f32.mrf.mxu0
    %v568 = vadd.f32 %v351, %v567
    %569 = vmatprep.mubr.f32.mxu0 0.0
    %570 = vmatmul.mubr.f32.gmra.mxu0 %v428
    %v571 = vpop.f32.mrf.mxu0
    %v572 = vadd.f32 %v356, %v571
    %v573 = vpop.f32.mrf.mxu0
    %v574 = vadd.f32 %v356, %v573
    %575 = vmatprep.mubr.f32.mxu0 0.0
    %576 = vmatmul.mubr.f32.gmra.mxu0 %v431
    %v577 = vpop.f32.mrf.mxu0
    %v578 = vadd.f32 %v361, %v577
    %v579 = vpop.f32.mrf.mxu0
    %v580 = vadd.f32 %v361, %v579
    %581 = vmatprep.mubr.f32.mxu0 0.0
    %582 = vmatmul.mubr.f32.gmra.mxu0 %v434
    %v583 = vpop.f32.mrf.mxu0
    %v584 = vadd.f32 %v366, %v583
    %v585 = vpop.f32.mrf.mxu0
    %v586 = vadd.f32 %v366, %v585
    %587 = vmatprep.mubr.f32.mxu0 0.0
    %588 = vmatmul.mubr.f32.gmra.mxu0 %v437
    %v589 = vpop.f32.mrf.mxu0
    %v590 = vadd.f32 %v371, %v589
    %v591 = vpop.f32.mrf.mxu0
    %v592 = vadd.f32 %v371, %v591
    %593 = vmatprep.mubr.f32.mxu0 0.0
    %594 = vmatmul.mubr.f32.gmra.mxu0 %v440
    %v595 = vpop.f32.mrf.mxu0
    %v596 = vadd.f32 %v376, %v595
    %v597 = vpop.f32.mrf.mxu0
    %v598 = vadd.f32 %v376, %v597
    %599 = vmatprep.mubr.f32.mxu0 0.0
    %600 = vmatmul.mubr.f32.gmra.mxu0 %v443
    %v601 = vpop.f32.mrf.mxu0
    %v602 = vadd.f32 %v381, %v601
    %v603 = vpop.f32.mrf.mxu0
    %v604 = vadd.f32 %v381, %v603
    %605 = vmatprep.mubr.f32.mxu0 0.0
    %606 = vmatmul.mubr.f32.gmra.mxu0 %v446
    %v607 = vpop.f32.mrf.mxu0
    %v608 = vadd.f32 %v386, %v607
    %v609 = vpop.f32.mrf.mxu0
    %v610 = vadd.f32 %v386, %v609
    %611 = vmatprep.mubr.f32.mxu0 0.0
    %612 = vmatmul.mubr.f32.gmra.mxu0 %v449
    %v613 = vpop.f32.mrf.mxu0
    %v614 = vadd.f32 %v391, %v613
    %v615 = vpop.f32.mrf.mxu0
    %v616 = vadd.f32 %v391, %v615
    %617 = vmatprep.mubr.f32.mxu0 0.0
    %618 = vmatmul.mubr.f32.gmra.mxu0 %v452
    %v619 = vpop.f32.mrf.mxu0
    %v620 = vadd.f32 %v396, %v619
    %v621 = vpop.f32.mrf.mxu0
    %v622 = vadd.f32 %v396, %v621
    %623 = vmatprep.mubr.f32.mxu0 0.0
    %624 = vmatmul.mubr.f32.gmra.mxu0 %v455
    %v625 = vpop.f32.mrf.mxu0
    %v626 = vadd.f32 %v401, %v625
    %v627 = vpop.f32.mrf.mxu0
    %v628 = vadd.f32 %v401, %v627
    %629 = vdwg.mxu0
    %v630 = vmax.f32 %v572, %v574
    %631 = vmax.xlane.f32.xlu0 %v630
    %v632 = vpop.xlane.xlu0 %631
    %v633 = vmax.f32 %v578, %v580
    %634 = vmax.xlane.f32.xlu0 %v633
    %v635 = vpop.xlane.xlu0 %634
    %v636 = vmax.f32 %v584, %v586
    %637 = vmax.xlane.f32.xlu0 %v636
    %v638 = vpop.xlane.xlu0 %637
    %v639 = vmax.f32 %v590, %v592
    %640 = vmax.xlane.f32.xlu0 %v639
    %v641 = vpop.xlane.xlu0 %640
    %v642 = vmax.f32 %v596, %v598
    %643 = vmax.xlane.f32.xlu0 %v642
    %v644 = vpop.xlane.xlu0 %643
    %v645 = vmax.f32 %v602, %v604
    %646 = vmax.xlane.f32.xlu0 %v645
    %v647 = vpop.xlane.xlu0 %646
    %v648 = vmax.f32 %v608, %v610
    %649 = vmax.xlane.f32.xlu0 %v648
    %v650 = vpop.xlane.xlu0 %649
    %v651 = vmax.f32 %v614, %v616
    %652 = vmax.xlane.f32.xlu0 %v651
    %v653 = vpop.xlane.xlu0 %652
    %v654 = vsub.f32 %v572, %v632
    %v655 = vsub.f32 %v574, %v632
    %v656 = vsub.f32 %v578, %v635
    %v657 = vsub.f32 %v580, %v635
    %v658 = vsub.f32 %v584, %v638
    %v659 = vsub.f32 %v586, %v638
    %v660 = vsub.f32 %v590, %v641
    %v661 = vsub.f32 %v592, %v641
    %v662 = vsub.f32 %v596, %v644
    %v663 = vsub.f32 %v598, %v644
    %v664 = vsub.f32 %v602, %v647
    %v665 = vsub.f32 %v604, %v647
    %v666 = vsub.f32 %v608, %v650
    %v667 = vsub.f32 %v610, %v650
    %v668 = vsub.f32 %v614, %v653
    %v669 = vsub.f32 %v616, %v653
    %v670 = vmul.f32 %v654, 1.442695
    %v671 = vpow.pop %v670
    %v672 = vmul.f32 %v655, 1.442695
    %v673 = vpow.pop %v672
    %v674 = vmul.f32 %v656, 1.442695
    %v675 = vpow.pop %v674
    %v676 = vmul.f32 %v657, 1.442695
    %v677 = vpow.pop %v676
    %v678 = vmul.f32 %v658, 1.442695
    %v679 = vpow.pop %v678
    %v680 = vmul.f32 %v659, 1.442695
    %v681 = vpow.pop %v680
    %v682 = vmul.f32 %v660, 1.442695
    %v683 = vpow.pop %v682
    %v684 = vmul.f32 %v661, 1.442695
    %v685 = vpow.pop %v684
    %v686 = vmul.f32 %v662, 1.442695
    %v687 = vpow.pop %v686
    %v688 = vmul.f32 %v663, 1.442695
    %v689 = vpow.pop %v688
    %v690 = vmul.f32 %v664, 1.442695
    %v691 = vpow.pop %v690
    %v692 = vmul.f32 %v665, 1.442695
    %v693 = vpow.pop %v692
    %v694 = vmul.f32 %v666, 1.442695
    %v695 = vpow.pop %v694
    %v696 = vmul.f32 %v667, 1.442695
    %v697 = vpow.pop %v696
    %v698 = vmul.f32 %v668, 1.442695
    %v699 = vpow.pop %v698
    %v700 = vmul.f32 %v669, 1.442695
    %v701 = vpow.pop %v700
    %702 = vadd.xlane.f32.xlu0 %v671
    %v703 = vpop.xlane.xlu0 %702
    %704 = vadd.xlane.f32.xlu0 %v675
    %v705 = vpop.xlane.xlu0 %704
    %706 = vadd.xlane.f32.xlu0 %v679
    %v707 = vpop.xlane.xlu0 %706
    %708 = vadd.xlane.f32.xlu0 %v683
    %v709 = vpop.xlane.xlu0 %708
    %710 = vadd.xlane.f32.xlu0 %v687
    %v711 = vpop.xlane.xlu0 %710
    %712 = vadd.xlane.f32.xlu0 %v691
    %v713 = vpop.xlane.xlu0 %712
    %714 = vadd.xlane.f32.xlu0 %v695
    %v715 = vpop.xlane.xlu0 %714
    %716 = vadd.xlane.f32.xlu0 %v699
    %v717 = vpop.xlane.xlu0 %716
    %v718 = vrcp.pop %v703
    %v719 = vrcp.pop %v705
    %v720 = vrcp.pop %v707
    %v721 = vrcp.pop %v709
    %v722 = vrcp.pop %v711
    %v723 = vrcp.pop %v713
    %v724 = vrcp.pop %v715
    %v725 = vrcp.pop %v717
    %v726 = vmul.f32 %v671, %v718
    %v727 = vmul.f32 %v675, %v719
    %v728 = vmul.f32 %v679, %v720
    %v729 = vmul.f32 %v683, %v721
    %v730 = vmul.f32 %v687, %v722
    %v731 = vmul.f32 %v691, %v723
    %v732 = vmul.f32 %v695, %v724
    %v733 = vmul.f32 %v699, %v725
    %v735 = vrot.slane %v620, 4
    %737 = vmatprep.subr.mxu0 0.0
    %738 = vmatpush1.xpose.msra.mxu0 0.0
    %739 = vmatprep.subr.mxu0 0.0
    %740 = vmatpush1.xpose.msra.mxu0 0.0
    %741 = vmatprep.subr.mxu0 0.0
    %742 = vmatpush1.xpose.msra.mxu0 0.0
    %743 = vmatprep.subr.mxu0 0.0
    %744 = vmatpush1.xpose.msra.mxu0 0.0
    %745 = vmatprep.subr.mxu0 0.0
    %746 = vmatpush1.xpose.msra.mxu0 0.0
    %747 = vmatprep.subr.mxu0 0.0
    %748 = vmatpush1.xpose.msra.mxu0 0.0
    %749 = vmatprep.subr.mxu0 0.0
    %750 = vmatpush1.xpose.msra.mxu0 0.0
    %751 = vmatprep.subr.mxu0 0.0
    %752 = vmatpush1.xpose.msra.mxu0 0.0
    %753 = vmatprep.subr.mxu0 0.0
    %754 = vmatpush1.xpose.msra.mxu0 0.0
    %755 = vmatprep.subr.mxu0 0.0
    %756 = vmatpush1.xpose.msra.mxu0 0.0
    %757 = vmatprep.subr.mxu0 0.0
    %758 = vmatpush1.xpose.msra.mxu0 0.0
    %759 = vmatprep.subr.mxu0 0.0
    %760 = vmatpush1.xpose.msra.mxu0 0.0
    %761 = vmatprep.subr.mxu0 0.0
    %762 = vmatpush1.xpose.msra.mxu0 0.0
    %763 = vmatprep.subr.mxu0 0.0
    %764 = vmatpush1.xpose.msra.mxu0 0.0
    %765 = vmatprep.subr.mxu0 0.0
    %766 = vmatpush1.xpose.msra.mxu0 %v729
    %767 = vmatprep.subr.mxu0 0.0
    %768 = vmatpush1.xpose.msra.mxu0 %v728
    %769 = vmatprep.subr.mxu0 0.0
    %770 = vmatpush2.xpose.msra.mxu0 0.0
    %771 = vmatprep.subr.mxu0 0.0
    %772 = vmatpush2.xpose.msra.mxu0 0.0
    %773 = vmatprep.subr.mxu0 0.0
    %774 = vmatpush2.xpose.msra.mxu0 0.0
    %775 = vmatprep.subr.mxu0 0.0
    %776 = vmatpush2.xpose.msra.mxu0 0.0
    %777 = vmatprep.subr.mxu0 0.0
    %778 = vmatpush2.xpose.msra.mxu0 0.0
    %779 = vmatprep.subr.mxu0 0.0
    %780 = vmatpush2.xpose.msra.mxu0 0.0
    %781 = vmatprep.subr.mxu0 0.0
    %782 = vmatpush2.xpose.msra.mxu0 0.0
    %783 = vmatprep.subr.mxu0 0.0
    %784 = vmatpush2.xpose.msra.mxu0 0.0
    %785 = vmatprep.subr.mxu0 0.0
    %786 = vmatpush2.xpose.msra.mxu0 0.0
    %787 = vmatprep.subr.mxu0 0.0
    %788 = vmatpush2.xpose.msra.mxu0 0.0
    %789 = vmatprep.subr.mxu0 0.0
    %790 = vmatpush2.xpose.msra.mxu0 0.0
    %791 = vmatprep.subr.mxu0 0.0
    %792 = vmatpush2.xpose.msra.mxu0 0.0
    %793 = vmatprep.subr.mxu0 0.0
    %794 = vmatpush2.xpose.msra.mxu0 0.0
    %795 = vmatprep.subr.mxu0 0.0
    %796 = vmatpush2.xpose.msra.mxu0 0.0
    %797 = vmatprep.subr.mxu0 0.0
    %798 = vmatpush2.xpose.msra.mxu0 0.0
    %799 = vmatprep.subr.mxu0 0.0
    %800 = vmatpush2.xpose.msra.mxu0 0.0
    %801 = vmatprep.mubr.f32.mxu0 0.0
    %802 = vmatmul.mubr.f32.gmra.mxu0 %v735
    %v803 = vpop.f32.mrf.mxu0
    %v804 = vadd.f32 0.0, %v803
    %v805 = vpop.f32.mrf.mxu0
    %806 = vdwg.mxu0
    %807 = vmatprep.subr.mxu0 0.0
    %808 = vmatpush1.xpose.msra.mxu0 0.0
    %809 = vmatprep.subr.mxu0 0.0
    %810 = vmatpush1.xpose.msra.mxu0 0.0
    %811 = vmatprep.subr.mxu0 0.0
    %812 = vmatpush1.xpose.msra.mxu0 0.0
    %813 = vmatprep.subr.mxu0 0.0
    %814 = vmatpush1.xpose.msra.mxu0 0.0
    %815 = vmatprep.subr.mxu0 0.0
    %816 = vmatpush1.xpose.msra.mxu0 0.0
    %817 = vmatprep.subr.mxu0 0.0
    %818 = vmatpush1.xpose.msra.mxu0 0.0
    %819 = vmatprep.subr.mxu0 0.0
    %820 = vmatpush1.xpose.msra.mxu0 0.0
    %821 = vmatprep.subr.mxu0 0.0
    %822 = vmatpush1.xpose.msra.mxu0 0.0
    %823 = vmatprep.subr.mxu0 0.0
    %824 = vmatpush1.xpose.msra.mxu0 0.0
    %825 = vmatprep.subr.mxu0 0.0
    %826 = vmatpush1.xpose.msra.mxu0 0.0
    %827 = vmatprep.subr.mxu0 0.0
    %828 = vmatpush1.xpose.msra.mxu0 0.0
    %829 = vmatprep.subr.mxu0 0.0
    %830 = vmatpush1.xpose.msra.mxu0 0.0
    %831 = vmatprep.subr.mxu0 0.0
    %832 = vmatpush1.xpose.msra.mxu0 0.0
    %833 = vmatprep.subr.mxu0 0.0
    %834 = vmatpush1.xpose.msra.mxu0 0.0
    %835 = vmatprep.subr.mxu0 0.0
    %836 = vmatpush1.xpose.msra.mxu0 %v727
    %837 = vmatprep.subr.mxu0 0.0
    %838 = vmatpush1.xpose.msra.mxu0 %v726
    %839 = vmatprep.subr.mxu0 0.0
    %840 = vmatpush2.xpose.msra.mxu0 0.0
    %841 = vmatprep.subr.mxu0 0.0
    %842 = vmatpush2.xpose.msra.mxu0 0.0
    %843 = vmatprep.subr.mxu0 0.0
    %844 = vmatpush2.xpose.msra.mxu0 0.0
    %845 = vmatprep.subr.mxu0 0.0
    %846 = vmatpush2.xpose.msra.mxu0 0.0
    %847 = vmatprep.subr.mxu0 0.0
    %848 = vmatpush2.xpose.msra.mxu0 0.0
    %849 = vmatprep.subr.mxu0 0.0
    %850 = vmatpush2.xpose.msra.mxu0 0.0
    %851 = vmatprep.subr.mxu0 0.0
    %852 = vmatpush2.xpose.msra.mxu0 0.0
    %853 = vmatprep.subr.mxu0 0.0
    %854 = vmatpush2.xpose.msra.mxu0 0.0
    %855 = vmatprep.subr.mxu0 0.0
    %856 = vmatpush2.xpose.msra.mxu0 0.0
    %857 = vmatprep.subr.mxu0 0.0
    %858 = vmatpush2.xpose.msra.mxu0 0.0
    %859 = vmatprep.subr.mxu0 0.0
    %860 = vmatpush2.xpose.msra.mxu0 0.0
    %861 = vmatprep.subr.mxu0 0.0
    %862 = vmatpush2.xpose.msra.mxu0 0.0
    %863 = vmatprep.subr.mxu0 0.0
    %864 = vmatpush2.xpose.msra.mxu0 0.0
    %865 = vmatprep.subr.mxu0 0.0
    %866 = vmatpush2.xpose.msra.mxu0 0.0
    %867 = vmatprep.subr.mxu0 0.0
    %868 = vmatpush2.xpose.msra.mxu0 0.0
    %869 = vmatprep.subr.mxu0 0.0
    %870 = vmatpush2.xpose.msra.mxu0 0.0
    %871 = vmatprep.mubr.f32.mxu0 0.0
    %872 = vmatmul.mubr.f32.gmra.mxu0 %v620
    %v873 = vpop.f32.mrf.mxu0
    %v874 = vadd.f32 %v804, %v873
    %v875 = vpop.f32.mrf.mxu0
    %876 = vdwg.mxu0
    %877 = vmatprep.subr.mxu0 0.0
    %878 = vmatpush1.xpose.msra.mxu0 0.0
    %879 = vmatprep.subr.mxu0 0.0
    %880 = vmatpush1.xpose.msra.mxu0 0.0
    %881 = vmatprep.subr.mxu0 0.0
    %882 = vmatpush1.xpose.msra.mxu0 0.0
    %883 = vmatprep.subr.mxu0 0.0
    %884 = vmatpush1.xpose.msra.mxu0 0.0
    %885 = vmatprep.subr.mxu0 0.0
    %886 = vmatpush1.xpose.msra.mxu0 0.0
    %887 = vmatprep.subr.mxu0 0.0
    %888 = vmatpush1.xpose.msra.mxu0 0.0
    %889 = vmatprep.subr.mxu0 0.0
    %890 = vmatpush1.xpose.msra.mxu0 0.0
    %891 = vmatprep.subr.mxu0 0.0
    %892 = vmatpush1.xpose.msra.mxu0 0.0
    %893 = vmatprep.subr.mxu0 0.0
    %894 = vmatpush1.xpose.msra.mxu0 0.0
    %895 = vmatprep.subr.mxu0 0.0
    %896 = vmatpush1.xpose.msra.mxu0 0.0
    %897 = vmatprep.subr.mxu0 0.0
    %898 = vmatpush1.xpose.msra.mxu0 0.0
    %899 = vmatprep.subr.mxu0 0.0
    %900 = vmatpush1.xpose.msra.mxu0 0.0
    %901 = vmatprep.subr.mxu0 0.0
    %902 = vmatpush1.xpose.msra.mxu0 0.0
    %903 = vmatprep.subr.mxu0 0.0
    %904 = vmatpush1.xpose.msra.mxu0 0.0
    %905 = vmatprep.subr.mxu0 0.0
    %906 = vmatpush1.xpose.msra.mxu0 %v731
    %907 = vmatprep.subr.mxu0 0.0
    %908 = vmatpush1.xpose.msra.mxu0 %v730
    %909 = vmatprep.subr.mxu0 0.0
    %910 = vmatpush2.xpose.msra.mxu0 0.0
    %911 = vmatprep.subr.mxu0 0.0
    %912 = vmatpush2.xpose.msra.mxu0 0.0
    %913 = vmatprep.subr.mxu0 0.0
    %914 = vmatpush2.xpose.msra.mxu0 0.0
    %915 = vmatprep.subr.mxu0 0.0
    %916 = vmatpush2.xpose.msra.mxu0 0.0
    %917 = vmatprep.subr.mxu0 0.0
    %918 = vmatpush2.xpose.msra.mxu0 0.0
    %919 = vmatprep.subr.mxu0 0.0
    %920 = vmatpush2.xpose.msra.mxu0 0.0
    %921 = vmatprep.subr.mxu0 0.0
    %922 = vmatpush2.xpose.msra.mxu0 0.0
    %923 = vmatprep.subr.mxu0 0.0
    %924 = vmatpush2.xpose.msra.mxu0 0.0
    %925 = vmatprep.subr.mxu0 0.0
    %926 = vmatpush2.xpose.msra.mxu0 0.0
    %927 = vmatprep.subr.mxu0 0.0
    %928 = vmatpush2.xpose.msra.mxu0 0.0
    %929 = vmatprep.subr.mxu0 0.0
    %930 = vmatpush2.xpose.msra.mxu0 0.0
    %931 = vmatprep.subr.mxu0 0.0
    %932 = vmatpush2.xpose.msra.mxu0 0.0
    %933 = vmatprep.subr.mxu0 0.0
    %934 = vmatpush2.xpose.msra.mxu0 0.0
    %935 = vmatprep.subr.mxu0 0.0
    %936 = vmatpush2.xpose.msra.mxu0 0.0
    %937 = vmatprep.subr.mxu0 0.0
    %938 = vmatpush2.xpose.msra.mxu0 0.0
    %939 = vmatprep.subr.mxu0 0.0
    %940 = vmatpush2.xpose.msra.mxu0 0.0
    %941 = vmatprep.mubr.f32.mxu0 0.0
    %942 = vmatmul.mubr.f32.gmra.mxu0 %v626
    %v943 = vpop.f32.mrf.mxu0
    %v944 = vadd.f32 0.0, %v943
    %v945 = vpop.f32.mrf.mxu0
    %946 = vdwg.mxu0
    %v947 = vadd.f32 %v874, %v944
    %v949 = vrot.slane %v626, 4
    %951 = vmatprep.subr.mxu0 0.0
    %952 = vmatpush1.xpose.msra.mxu0 0.0
    %953 = vmatprep.subr.mxu0 0.0
    %954 = vmatpush1.xpose.msra.mxu0 0.0
    %955 = vmatprep.subr.mxu0 0.0
    %956 = vmatpush1.xpose.msra.mxu0 0.0
    %957 = vmatprep.subr.mxu0 0.0
    %958 = vmatpush1.xpose.msra.mxu0 0.0
    %959 = vmatprep.subr.mxu0 0.0
    %960 = vmatpush1.xpose.msra.mxu0 0.0
    %961 = vmatprep.subr.mxu0 0.0
    %962 = vmatpush1.xpose.msra.mxu0 0.0
    %963 = vmatprep.subr.mxu0 0.0
    %964 = vmatpush1.xpose.msra.mxu0 0.0
    %965 = vmatprep.subr.mxu0 0.0
    %966 = vmatpush1.xpose.msra.mxu0 0.0
    %967 = vmatprep.subr.mxu0 0.0
    %968 = vmatpush1.xpose.msra.mxu0 0.0
    %969 = vmatprep.subr.mxu0 0.0
    %970 = vmatpush1.xpose.msra.mxu0 0.0
    %971 = vmatprep.subr.mxu0 0.0
    %972 = vmatpush1.xpose.msra.mxu0 0.0
    %973 = vmatprep.subr.mxu0 0.0
    %974 = vmatpush1.xpose.msra.mxu0 0.0
    %975 = vmatprep.subr.mxu0 0.0
    %976 = vmatpush1.xpose.msra.mxu0 0.0
    %977 = vmatprep.subr.mxu0 0.0
    %978 = vmatpush1.xpose.msra.mxu0 0.0
    %979 = vmatprep.subr.mxu0 0.0
    %980 = vmatpush1.xpose.msra.mxu0 %v733
    %981 = vmatprep.subr.mxu0 0.0
    %982 = vmatpush1.xpose.msra.mxu0 %v732
    %983 = vmatprep.subr.mxu0 0.0
    %984 = vmatpush2.xpose.msra.mxu0 0.0
    %985 = vmatprep.subr.mxu0 0.0
    %986 = vmatpush2.xpose.msra.mxu0 0.0
    %987 = vmatprep.subr.mxu0 0.0
    %988 = vmatpush2.xpose.msra.mxu0 0.0
    %989 = vmatprep.subr.mxu0 0.0
    %990 = vmatpush2.xpose.msra.mxu0 0.0
    %991 = vmatprep.subr.mxu0 0.0
    %992 = vmatpush2.xpose.msra.mxu0 0.0
    %993 = vmatprep.subr.mxu0 0.0
    %994 = vmatpush2.xpose.msra.mxu0 0.0
    %995 = vmatprep.subr.mxu0 0.0
    %996 = vmatpush2.xpose.msra.mxu0 0.0
    %997 = vmatprep.subr.mxu0 0.0
    %998 = vmatpush2.xpose.msra.mxu0 0.0
    %999 = vmatprep.subr.mxu0 0.0
    %1000 = vmatpush2.xpose.msra.mxu0 0.0
    %1001 = vmatprep.subr.mxu0 0.0
    %1002 = vmatpush2.xpose.msra.mxu0 0.0
    %1003 = vmatprep.subr.mxu0 0.0
    %1004 = vmatpush2.xpose.msra.mxu0 0.0
    %1005 = vmatprep.subr.mxu0 0.0
    %1006 = vmatpush2.xpose.msra.mxu0 0.0
    %1007 = vmatprep.subr.mxu0 0.0
    %1008 = vmatpush2.xpose.msra.mxu0 0.0
    %1009 = vmatprep.subr.mxu0 0.0
    %1010 = vmatpush2.xpose.msra.mxu0 0.0
    %1011 = vmatprep.subr.mxu0 0.0
    %1012 = vmatpush2.xpose.msra.mxu0 0.0
    %1013 = vmatprep.subr.mxu0 0.0
    %1014 = vmatpush2.xpose.msra.mxu0 0.0
    %1015 = vmatprep.mubr.f32.mxu0 0.0
    %1016 = vmatmul.mubr.f32.gmra.mxu0 %v949
    %v1017 = vpop.f32.mrf.mxu0
    %v1018 = vadd.f32 0.0, %v1017
    %v1019 = vpop.f32.mrf.mxu0
    %1020 = vdwg.mxu0
    %v1021 = vadd.f32 %v947, %v1018
    %1022 = vadd.xlane.f32.xlu0 %v673
    %v1023 = vpop.xlane.xlu0 %1022
    %1024 = vadd.xlane.f32.xlu0 %v677
    %v1025 = vpop.xlane.xlu0 %1024
    %1026 = vadd.xlane.f32.xlu0 %v681
    %v1027 = vpop.xlane.xlu0 %1026
    %1028 = vadd.xlane.f32.xlu0 %v685
    %v1029 = vpop.xlane.xlu0 %1028
    %1030 = vadd.xlane.f32.xlu0 %v689
    %v1031 = vpop.xlane.xlu0 %1030
    %1032 = vadd.xlane.f32.xlu0 %v693
    %v1033 = vpop.xlane.xlu0 %1032
    %1034 = vadd.xlane.f32.xlu0 %v697
    %v1035 = vpop.xlane.xlu0 %1034
    %1036 = vadd.xlane.f32.xlu0 %v701
    %v1037 = vpop.xlane.xlu0 %1036
    %v1038 = vrcp.pop %v1023
    %v1039 = vrcp.pop %v1025
    %v1040 = vrcp.pop %v1027
    %v1041 = vrcp.pop %v1029
    %v1042 = vrcp.pop %v1031
    %v1043 = vrcp.pop %v1033
    %v1044 = vrcp.pop %v1035
    %v1045 = vrcp.pop %v1037
    %v1046 = vmul.f32 %v673, %v1038
    %v1047 = vmul.f32 %v677, %v1039
    %v1048 = vmul.f32 %v681, %v1040
    %v1049 = vmul.f32 %v685, %v1041
    %v1050 = vmul.f32 %v689, %v1042
    %v1051 = vmul.f32 %v693, %v1043
    %v1052 = vmul.f32 %v697, %v1044
    %v1053 = vmul.f32 %v701, %v1045
    %v1055 = vrot.slane %v622, 4
    %1057 = vmatprep.subr.mxu0 0.0
    %1058 = vmatpush1.xpose.msra.mxu0 0.0
    %1059 = vmatprep.subr.mxu0 0.0
    %1060 = vmatpush1.xpose.msra.mxu0 0.0
    %1061 = vmatprep.subr.mxu0 0.0
    %1062 = vmatpush1.xpose.msra.mxu0 0.0
    %1063 = vmatprep.subr.mxu0 0.0
    %1064 = vmatpush1.xpose.msra.mxu0 0.0
    %1065 = vmatprep.subr.mxu0 0.0
    %1066 = vmatpush1.xpose.msra.mxu0 0.0
    %1067 = vmatprep.subr.mxu0 0.0
    %1068 = vmatpush1.xpose.msra.mxu0 0.0
    %1069 = vmatprep.subr.mxu0 0.0
    %1070 = vmatpush1.xpose.msra.mxu0 0.0
    %1071 = vmatprep.subr.mxu0 0.0
    %1072 = vmatpush1.xpose.msra.mxu0 0.0
    %1073 = vmatprep.subr.mxu0 0.0
    %1074 = vmatpush1.xpose.msra.mxu0 0.0
    %1075 = vmatprep.subr.mxu0 0.0
    %1076 = vmatpush1.xpose.msra.mxu0 0.0
    %1077 = vmatprep.subr.mxu0 0.0
    %1078 = vmatpush1.xpose.msra.mxu0 0.0
    %1079 = vmatprep.subr.mxu0 0.0
    %1080 = vmatpush1.xpose.msra.mxu0 0.0
    %1081 = vmatprep.subr.mxu0 0.0
    %1082 = vmatpush1.xpose.msra.mxu0 0.0
    %1083 = vmatprep.subr.mxu0 0.0
    %1084 = vmatpush1.xpose.msra.mxu0 0.0
    %1085 = vmatprep.subr.mxu0 0.0
    %1086 = vmatpush1.xpose.msra.mxu0 %v1049
    %1087 = vmatprep.subr.mxu0 0.0
    %1088 = vmatpush1.xpose.msra.mxu0 %v1048
    %1089 = vmatprep.subr.mxu0 0.0
    %1090 = vmatpush2.xpose.msra.mxu0 0.0
    %1091 = vmatprep.subr.mxu0 0.0
    %1092 = vmatpush2.xpose.msra.mxu0 0.0
    %1093 = vmatprep.subr.mxu0 0.0
    %1094 = vmatpush2.xpose.msra.mxu0 0.0
    %1095 = vmatprep.subr.mxu0 0.0
    %1096 = vmatpush2.xpose.msra.mxu0 0.0
    %1097 = vmatprep.subr.mxu0 0.0
    %1098 = vmatpush2.xpose.msra.mxu0 0.0
    %1099 = vmatprep.subr.mxu0 0.0
    %1100 = vmatpush2.xpose.msra.mxu0 0.0
    %1101 = vmatprep.subr.mxu0 0.0
    %1102 = vmatpush2.xpose.msra.mxu0 0.0
    %1103 = vmatprep.subr.mxu0 0.0
    %1104 = vmatpush2.xpose.msra.mxu0 0.0
    %1105 = vmatprep.subr.mxu0 0.0
    %1106 = vmatpush2.xpose.msra.mxu0 0.0
    %1107 = vmatprep.subr.mxu0 0.0
    %1108 = vmatpush2.xpose.msra.mxu0 0.0
    %1109 = vmatprep.subr.mxu0 0.0
    %1110 = vmatpush2.xpose.msra.mxu0 0.0
    %1111 = vmatprep.subr.mxu0 0.0
    %1112 = vmatpush2.xpose.msra.mxu0 0.0
    %1113 = vmatprep.subr.mxu0 0.0
    %1114 = vmatpush2.xpose.msra.mxu0 0.0
    %1115 = vmatprep.subr.mxu0 0.0
    %1116 = vmatpush2.xpose.msra.mxu0 0.0
    %1117 = vmatprep.subr.mxu0 0.0
    %1118 = vmatpush2.xpose.msra.mxu0 0.0
    %1119 = vmatprep.subr.mxu0 0.0
    %1120 = vmatpush2.xpose.msra.mxu0 0.0
    %1121 = vmatprep.mubr.f32.mxu0 0.0
    %1122 = vmatmul.mubr.f32.gmra.mxu0 %v1055
    %v1123 = vpop.f32.mrf.mxu0
    %v1124 = vadd.f32 0.0, %v1123
    %v1125 = vpop.f32.mrf.mxu0
    %1126 = vdwg.mxu0
    %1127 = vmatprep.subr.mxu0 0.0
    %1128 = vmatpush1.xpose.msra.mxu0 0.0
    %1129 = vmatprep.subr.mxu0 0.0
    %1130 = vmatpush1.xpose.msra.mxu0 0.0
    %1131 = vmatprep.subr.mxu0 0.0
    %1132 = vmatpush1.xpose.msra.mxu0 0.0
    %1133 = vmatprep.subr.mxu0 0.0
    %1134 = vmatpush1.xpose.msra.mxu0 0.0
    %1135 = vmatprep.subr.mxu0 0.0
    %1136 = vmatpush1.xpose.msra.mxu0 0.0
    %1137 = vmatprep.subr.mxu0 0.0
    %1138 = vmatpush1.xpose.msra.mxu0 0.0
    %1139 = vmatprep.subr.mxu0 0.0
    %1140 = vmatpush1.xpose.msra.mxu0 0.0
    %1141 = vmatprep.subr.mxu0 0.0
    %1142 = vmatpush1.xpose.msra.mxu0 0.0
    %1143 = vmatprep.subr.mxu0 0.0
    %1144 = vmatpush1.xpose.msra.mxu0 0.0
    %1145 = vmatprep.subr.mxu0 0.0
    %1146 = vmatpush1.xpose.msra.mxu0 0.0
    %1147 = vmatprep.subr.mxu0 0.0
    %1148 = vmatpush1.xpose.msra.mxu0 0.0
    %1149 = vmatprep.subr.mxu0 0.0
    %1150 = vmatpush1.xpose.msra.mxu0 0.0
    %1151 = vmatprep.subr.mxu0 0.0
    %1152 = vmatpush1.xpose.msra.mxu0 0.0
    %1153 = vmatprep.subr.mxu0 0.0
    %1154 = vmatpush1.xpose.msra.mxu0 0.0
    %1155 = vmatprep.subr.mxu0 0.0
    %1156 = vmatpush1.xpose.msra.mxu0 %v1047
    %1157 = vmatprep.subr.mxu0 0.0
    %1158 = vmatpush1.xpose.msra.mxu0 %v1046
    %1159 = vmatprep.subr.mxu0 0.0
    %1160 = vmatpush2.xpose.msra.mxu0 0.0
    %1161 = vmatprep.subr.mxu0 0.0
    %1162 = vmatpush2.xpose.msra.mxu0 0.0
    %1163 = vmatprep.subr.mxu0 0.0
    %1164 = vmatpush2.xpose.msra.mxu0 0.0
    %1165 = vmatprep.subr.mxu0 0.0
    %1166 = vmatpush2.xpose.msra.mxu0 0.0
    %1167 = vmatprep.subr.mxu0 0.0
    %1168 = vmatpush2.xpose.msra.mxu0 0.0
    %1169 = vmatprep.subr.mxu0 0.0
    %1170 = vmatpush2.xpose.msra.mxu0 0.0
    %1171 = vmatprep.subr.mxu0 0.0
    %1172 = vmatpush2.xpose.msra.mxu0 0.0
    %1173 = vmatprep.subr.mxu0 0.0
    %1174 = vmatpush2.xpose.msra.mxu0 0.0
    %1175 = vmatprep.subr.mxu0 0.0
    %1176 = vmatpush2.xpose.msra.mxu0 0.0
    %1177 = vmatprep.subr.mxu0 0.0
    %1178 = vmatpush2.xpose.msra.mxu0 0.0
    %1179 = vmatprep.subr.mxu0 0.0
    %1180 = vmatpush2.xpose.msra.mxu0 0.0
    %1181 = vmatprep.subr.mxu0 0.0
    %1182 = vmatpush2.xpose.msra.mxu0 0.0
    %1183 = vmatprep.subr.mxu0 0.0
    %1184 = vmatpush2.xpose.msra.mxu0 0.0
    %1185 = vmatprep.subr.mxu0 0.0
    %1186 = vmatpush2.xpose.msra.mxu0 0.0
    %1187 = vmatprep.subr.mxu0 0.0
    %1188 = vmatpush2.xpose.msra.mxu0 0.0
    %1189 = vmatprep.subr.mxu0 0.0
    %1190 = vmatpush2.xpose.msra.mxu0 0.0
    %1191 = vmatprep.mubr.f32.mxu0 0.0
    %1192 = vmatmul.mubr.f32.gmra.mxu0 %v622
    %v1193 = vpop.f32.mrf.mxu0
    %v1194 = vadd.f32 %v1124, %v1193
    %v1195 = vpop.f32.mrf.mxu0
    %1196 = vdwg.mxu0
    %1197 = vmatprep.subr.mxu0 0.0
    %1198 = vmatpush1.xpose.msra.mxu0 0.0
    %1199 = vmatprep.subr.mxu0 0.0
    %1200 = vmatpush1.xpose.msra.mxu0 0.0
    %1201 = vmatprep.subr.mxu0 0.0
    %1202 = vmatpush1.xpose.msra.mxu0 0.0
    %1203 = vmatprep.subr.mxu0 0.0
    %1204 = vmatpush1.xpose.msra.mxu0 0.0
    %1205 = vmatprep.subr.mxu0 0.0
    %1206 = vmatpush1.xpose.msra.mxu0 0.0
    %1207 = vmatprep.subr.mxu0 0.0
    %1208 = vmatpush1.xpose.msra.mxu0 0.0
    %1209 = vmatprep.subr.mxu0 0.0
    %1210 = vmatpush1.xpose.msra.mxu0 0.0
    %1211 = vmatprep.subr.mxu0 0.0
    %1212 = vmatpush1.xpose.msra.mxu0 0.0
    %1213 = vmatprep.subr.mxu0 0.0
    %1214 = vmatpush1.xpose.msra.mxu0 0.0
    %1215 = vmatprep.subr.mxu0 0.0
    %1216 = vmatpush1.xpose.msra.mxu0 0.0
    %1217 = vmatprep.subr.mxu0 0.0
    %1218 = vmatpush1.xpose.msra.mxu0 0.0
    %1219 = vmatprep.subr.mxu0 0.0
    %1220 = vmatpush1.xpose.msra.mxu0 0.0
    %1221 = vmatprep.subr.mxu0 0.0
    %1222 = vmatpush1.xpose.msra.mxu0 0.0
    %1223 = vmatprep.subr.mxu0 0.0
    %1224 = vmatpush1.xpose.msra.mxu0 0.0
    %1225 = vmatprep.subr.mxu0 0.0
    %1226 = vmatpush1.xpose.msra.mxu0 %v1051
    %1227 = vmatprep.subr.mxu0 0.0
    %1228 = vmatpush1.xpose.msra.mxu0 %v1050
    %1229 = vmatprep.subr.mxu0 0.0
    %1230 = vmatpush2.xpose.msra.mxu0 0.0
    %1231 = vmatprep.subr.mxu0 0.0
    %1232 = vmatpush2.xpose.msra.mxu0 0.0
    %1233 = vmatprep.subr.mxu0 0.0
    %1234 = vmatpush2.xpose.msra.mxu0 0.0
    %1235 = vmatprep.subr.mxu0 0.0
    %1236 = vmatpush2.xpose.msra.mxu0 0.0
    %1237 = vmatprep.subr.mxu0 0.0
    %1238 = vmatpush2.xpose.msra.mxu0 0.0
    %1239 = vmatprep.subr.mxu0 0.0
    %1240 = vmatpush2.xpose.msra.mxu0 0.0
    %1241 = vmatprep.subr.mxu0 0.0
    %1242 = vmatpush2.xpose.msra.mxu0 0.0
    %1243 = vmatprep.subr.mxu0 0.0
    %1244 = vmatpush2.xpose.msra.mxu0 0.0
    %1245 = vmatprep.subr.mxu0 0.0
    %1246 = vmatpush2.xpose.msra.mxu0 0.0
    %1247 = vmatprep.subr.mxu0 0.0
    %1248 = vmatpush2.xpose.msra.mxu0 0.0
    %1249 = vmatprep.subr.mxu0 0.0
    %1250 = vmatpush2.xpose.msra.mxu0 0.0
    %1251 = vmatprep.subr.mxu0 0.0
    %1252 = vmatpush2.xpose.msra.mxu0 0.0
    %1253 = vmatprep.subr.mxu0 0.0
    %1254 = vmatpush2.xpose.msra.mxu0 0.0
    %1255 = vmatprep.subr.mxu0 0.0
    %1256 = vmatpush2.xpose.msra.mxu0 0.0
    %1257 = vmatprep.subr.mxu0 0.0
    %1258 = vmatpush2.xpose.msra.mxu0 0.0
    %1259 = vmatprep.subr.mxu0 0.0
    %1260 = vmatpush2.xpose.msra.mxu0 0.0
    %1261 = vmatprep.mubr.f32.mxu0 0.0
    %1262 = vmatmul.mubr.f32.gmra.mxu0 %v628
    %v1263 = vpop.f32.mrf.mxu0
    %v1264 = vadd.f32 0.0, %v1263
    %v1265 = vpop.f32.mrf.mxu0
    %1266 = vdwg.mxu0
    %v1267 = vadd.f32 %v1194, %v1264
    %v1269 = vrot.slane %v628, 4
    %1271 = vmatprep.subr.mxu0 0.0
    %1272 = vmatpush1.xpose.msra.mxu0 0.0
    %1273 = vmatprep.subr.mxu0 0.0
    %1274 = vmatpush1.xpose.msra.mxu0 0.0
    %1275 = vmatprep.subr.mxu0 0.0
    %1276 = vmatpush1.xpose.msra.mxu0 0.0
    %1277 = vmatprep.subr.mxu0 0.0
    %1278 = vmatpush1.xpose.msra.mxu0 0.0
    %1279 = vmatprep.subr.mxu0 0.0
    %1280 = vmatpush1.xpose.msra.mxu0 0.0
    %1281 = vmatprep.subr.mxu0 0.0
    %1282 = vmatpush1.xpose.msra.mxu0 0.0
    %1283 = vmatprep.subr.mxu0 0.0
    %1284 = vmatpush1.xpose.msra.mxu0 0.0
    %1285 = vmatprep.subr.mxu0 0.0
    %1286 = vmatpush1.xpose.msra.mxu0 0.0
    %1287 = vmatprep.subr.mxu0 0.0
    %1288 = vmatpush1.xpose.msra.mxu0 0.0
    %1289 = vmatprep.subr.mxu0 0.0
    %1290 = vmatpush1.xpose.msra.mxu0 0.0
    %1291 = vmatprep.subr.mxu0 0.0
    %1292 = vmatpush1.xpose.msra.mxu0 0.0
    %1293 = vmatprep.subr.mxu0 0.0
    %1294 = vmatpush1.xpose.msra.mxu0 0.0
    %1295 = vmatprep.subr.mxu0 0.0
    %1296 = vmatpush1.xpose.msra.mxu0 0.0
    %1297 = vmatprep.subr.mxu0 0.0
    %1298 = vmatpush1.xpose.msra.mxu0 0.0
    %1299 = vmatprep.subr.mxu0 0.0
    %1300 = vmatpush1.xpose.msra.mxu0 %v1053
    %1301 = vmatprep.subr.mxu0 0.0
    %1302 = vmatpush1.xpose.msra.mxu0 %v1052
    %1303 = vmatprep.subr.mxu0 0.0
    %1304 = vmatpush2.xpose.msra.mxu0 0.0
    %1305 = vmatprep.subr.mxu0 0.0
    %1306 = vmatpush2.xpose.msra.mxu0 0.0
    %1307 = vmatprep.subr.mxu0 0.0
    %1308 = vmatpush2.xpose.msra.mxu0 0.0
    %1309 = vmatprep.subr.mxu0 0.0
    %1310 = vmatpush2.xpose.msra.mxu0 0.0
    %1311 = vmatprep.subr.mxu0 0.0
    %1312 = vmatpush2.xpose.msra.mxu0 0.0
    %1313 = vmatprep.subr.mxu0 0.0
    %1314 = vmatpush2.xpose.msra.mxu0 0.0
    %1315 = vmatprep.subr.mxu0 0.0
    %1316 = vmatpush2.xpose.msra.mxu0 0.0
    %1317 = vmatprep.subr.mxu0 0.0
    %1318 = vmatpush2.xpose.msra.mxu0 0.0
    %1319 = vmatprep.subr.mxu0 0.0
    %1320 = vmatpush2.xpose.msra.mxu0 0.0
    %1321 = vmatprep.subr.mxu0 0.0
    %1322 = vmatpush2.xpose.msra.mxu0 0.0
    %1323 = vmatprep.subr.mxu0 0.0
    %1324 = vmatpush2.xpose.msra.mxu0 0.0
    %1325 = vmatprep.subr.mxu0 0.0
    %1326 = vmatpush2.xpose.msra.mxu0 0.0
    %1327 = vmatprep.subr.mxu0 0.0
    %1328 = vmatpush2.xpose.msra.mxu0 0.0
    %1329 = vmatprep.subr.mxu0 0.0
    %1330 = vmatpush2.xpose.msra.mxu0 0.0
    %1331 = vmatprep.subr.mxu0 0.0
    %1332 = vmatpush2.xpose.msra.mxu0 0.0
    %1333 = vmatprep.subr.mxu0 0.0
    %1334 = vmatpush2.xpose.msra.mxu0 0.0
    %1335 = vmatprep.mubr.f32.mxu0 0.0
    %1336 = vmatmul.mubr.f32.gmra.mxu0 %v1269
    %v1337 = vpop.f32.mrf.mxu0
    %v1338 = vadd.f32 0.0, %v1337
    %v1339 = vpop.f32.mrf.mxu0
    %1340 = vdwg.mxu0
    %v1341 = vadd.f32 %v1267, %v1338
    %1342 = vrot.lane.b32.xlu0 %v620, 3
    %v1343 = vpop.permute.xlu0 %1342
    %1344 = vrot.lane.b32.xlu0 %v626, 3
    %v1345 = vpop.permute.xlu0 %1344
    %1346 = vrot.lane.b32.xlu0 %v622, 3
    %v1347 = vpop.permute.xlu0 %1346
    %1348 = vrot.lane.b32.xlu0 %v628, 3
    %v1349 = vpop.permute.xlu0 %1348
    %v1350 = vlaneseq
    %v1351 = vand.u32 %v1350, 127
    %vm1352 = vcmp.lt.s32.totalorder %v1351, 3
    %v1353 = vsel %vm1352, %v1343, %v1347
    %v1354 = vsel %vm1352, %v1345, %v1349
    %v1355 = vsel %vm1352, %v1347, %v1343
    %v1356 = vsel %vm1352, %v1349, %v1345
    %v1357 = vlaneseq
    %v1358 = vshrl.u32 %v1357, 7
    %v1359 = vsub.s32 0, %v1358
    %v1360 = vrot.slane %v97, %v1359
    %v1361 = vlaneseq
    %v1362 = vshrl.u32 %v1361, 7
    %v1363 = vsub.s32 0, %v1362
    %v1364 = vrot.slane %v98, %v1363
    %v1365 = vmul.f32 %v1355, %v1360
    %v1366 = vmul.f32 %v1353, %v1364
    %v1367 = vmul.f32 %v1356, %v1360
    %v1368 = vmul.f32 %v1354, %v1364
    %1369 = vrot.lane.b32.xlu0 %v620, 2
    %v1370 = vpop.permute.xlu0 %1369
    %1371 = vrot.lane.b32.xlu0 %v626, 2
    %v1372 = vpop.permute.xlu0 %1371
    %1373 = vrot.lane.b32.xlu0 %v622, 2
    %v1374 = vpop.permute.xlu0 %1373
    %1375 = vrot.lane.b32.xlu0 %v628, 2
    %v1376 = vpop.permute.xlu0 %1375
    %vm1377 = vcmp.lt.s32.totalorder %v1351, 2
    %v1378 = vsel %vm1377, %v1370, %v1374
    %v1379 = vsel %vm1377, %v1372, %v1376
    %v1380 = vsel %vm1377, %v1374, %v1370
    %v1381 = vsel %vm1377, %v1376, %v1372
    %v1382 = vlaneseq
    %v1383 = vshrl.u32 %v1382, 7
    %v1384 = vsub.s32 1, %v1383
    %v1385 = vrot.slane %v97, %v1384
    %v1386 = vlaneseq
    %v1387 = vshrl.u32 %v1386, 7
    %v1388 = vsub.s32 1, %v1387
    %v1389 = vrot.slane %v98, %v1388
    %v1390 = vmul.f32 %v1380, %v1385
    %v1391 = vmul.f32 %v1378, %v1389
    %v1392 = vmul.f32 %v1381, %v1385
    %v1393 = vmul.f32 %v1379, %v1389
    %1394 = vrot.lane.b32.xlu0 %v620, 1
    %v1395 = vpop.permute.xlu0 %1394
    %1396 = vrot.lane.b32.xlu0 %v626, 1
    %v1397 = vpop.permute.xlu0 %1396
    %1398 = vrot.lane.b32.xlu0 %v622, 1
    %v1399 = vpop.permute.xlu0 %1398
    %1400 = vrot.lane.b32.xlu0 %v628, 1
    %v1401 = vpop.permute.xlu0 %1400
    %vm1402 = vcmp.lt.s32.totalorder %v1351, 1
    %v1403 = vsel %vm1402, %v1395, %v1399
    %v1404 = vsel %vm1402, %v1397, %v1401
    %v1405 = vsel %vm1402, %v1399, %v1395
    %v1406 = vsel %vm1402, %v1401, %v1397
    %v1407 = vlaneseq
    %v1408 = vshrl.u32 %v1407, 7
    %v1409 = vsub.s32 2, %v1408
    %v1410 = vrot.slane %v97, %v1409
    %v1411 = vlaneseq
    %v1412 = vshrl.u32 %v1411, 7
    %v1413 = vsub.s32 2, %v1412
    %v1414 = vrot.slane %v98, %v1413
    %v1415 = vmul.f32 %v1405, %v1410
    %v1416 = vmul.f32 %v1403, %v1414
    %v1417 = vmul.f32 %v1406, %v1410
    %v1418 = vmul.f32 %v1404, %v1414
    %1419 = vrot.lane.b32.xlu0 %v620, 127
    %v1420 = vpop.permute.xlu0 %1419
    %1421 = vrot.lane.b32.xlu0 %v626, 127
    %v1422 = vpop.permute.xlu0 %1421
    %1423 = vrot.lane.b32.xlu0 %v622, 127
    %v1424 = vpop.permute.xlu0 %1423
    %1425 = vrot.lane.b32.xlu0 %v628, 127
    %v1426 = vpop.permute.xlu0 %1425
    %vm1427 = vcmp.lt.s32.totalorder %v1351, 127
    %v1428 = vsel %vm1427, %v1420, %v1424
    %v1429 = vsel %vm1427, %v1422, %v1426
    %v1430 = vsel %vm1427, %v1424, %v1420
    %v1431 = vsel %vm1427, %v1426, %v1422
    %v1432 = vlaneseq
    %v1433 = vshrl.u32 %v1432, 7
    %v1434 = vsub.s32 4, %v1433
    %v1435 = vrot.slane %v97, %v1434
    %v1436 = vlaneseq
    %v1437 = vshrl.u32 %v1436, 7
    %v1438 = vsub.s32 4, %v1437
    %v1439 = vrot.slane %v98, %v1438
    %v1440 = vmul.f32 %v1428, %v1435
    %v1441 = vmul.f32 %v1430, %v1439
    %v1442 = vmul.f32 %v1429, %v1435
    %v1443 = vmul.f32 %v1431, %v1439
    %1444 = vrot.lane.b32.xlu0 %v620, 126
    %v1445 = vpop.permute.xlu0 %1444
    %1446 = vrot.lane.b32.xlu0 %v626, 126
    %v1447 = vpop.permute.xlu0 %1446
    %1448 = vrot.lane.b32.xlu0 %v622, 126
    %v1449 = vpop.permute.xlu0 %1448
    %1450 = vrot.lane.b32.xlu0 %v628, 126
    %v1451 = vpop.permute.xlu0 %1450
    %vm1452 = vcmp.lt.s32.totalorder %v1351, 126
    %v1453 = vsel %vm1452, %v1445, %v1449
    %v1454 = vsel %vm1452, %v1447, %v1451
    %v1455 = vsel %vm1452, %v1449, %v1445
    %v1456 = vsel %vm1452, %v1451, %v1447
    %v1457 = vlaneseq
    %v1458 = vshrl.u32 %v1457, 7
    %v1459 = vsub.s32 5, %v1458
    %v1460 = vrot.slane %v97, %v1459
    %v1461 = vlaneseq
    %v1462 = vshrl.u32 %v1461, 7
    %v1463 = vsub.s32 5, %v1462
    %v1464 = vrot.slane %v98, %v1463
    %v1465 = vmul.f32 %v1453, %v1460
    %v1466 = vmul.f32 %v1455, %v1464
    %v1467 = vmul.f32 %v1454, %v1460
    %v1468 = vmul.f32 %v1456, %v1464
    %1469 = vrot.lane.b32.xlu0 %v620, 125
    %v1470 = vpop.permute.xlu0 %1469
    %1471 = vrot.lane.b32.xlu0 %v626, 125
    %v1472 = vpop.permute.xlu0 %1471
    %1473 = vrot.lane.b32.xlu0 %v622, 125
    %v1474 = vpop.permute.xlu0 %1473
    %1475 = vrot.lane.b32.xlu0 %v628, 125
    %v1476 = vpop.permute.xlu0 %1475
    %vm1477 = vcmp.lt.s32.totalorder %v1351, 125
    %v1478 = vsel %vm1477, %v1470, %v1474
    %v1479 = vsel %vm1477, %v1472, %v1476
    %v1480 = vsel %vm1477, %v1474, %v1470
    %v1481 = vsel %vm1477, %v1476, %v1472
    %v1482 = vlaneseq
    %v1483 = vshrl.u32 %v1482, 7
    %v1484 = vsub.s32 6, %v1483
    %v1485 = vrot.slane %v97, %v1484
    %v1486 = vlaneseq
    %v1487 = vshrl.u32 %v1486, 7
    %v1488 = vsub.s32 6, %v1487
    %v1489 = vrot.slane %v98, %v1488
    %v1490 = vmul.f32 %v1478, %v1485
    %v1491 = vmul.f32 %v1480, %v1489
    %v1492 = vmul.f32 %v1479, %v1485
    %v1493 = vmul.f32 %v1481, %v1489
    %v1494 = vld [vmem:[%s2] sm:$0xff]
    %v1495 = vld [vmem:[%s2 + $0x8] sm:$0xff]
    %v1496 = vld [vmem:[%s2 + $0x10] sm:$0xff]
    %v1497 = vld [vmem:[%s2 + $0x18] sm:$0xff]
    %v1498 = vld [vmem:[%s2 + $0x20] sm:$0xff]
    %v1499 = vld [vmem:[%s2 + $0x28] sm:$0xff]
    %v1500 = vld [vmem:[%s2 + $0x30] sm:$0xff]
    %v1501 = vld [vmem:[%s2 + $0x38] sm:$0xff]
    %vm1502 = vcmask 916480
    %v1504 = vsel %vm1502, %v1494, 0
    %v1507 = vsel %vm1502, %v1495, 0
    %v1510 = vsel %vm1502, %v1496, 0
    %v1513 = vsel %vm1502, %v1497, 0
    %v1516 = vsel %vm1502, %v1498, 0
    %v1519 = vsel %vm1502, %v1499, 0
    %v1522 = vsel %vm1502, %v1500, 0
    %v1525 = vsel %vm1502, %v1501, 0
    %1527 = vmatprep.subr.mxu0 0.0
    %1528 = vmatpush1.msra.mxu0 0.0
    %1529 = vmatprep.subr.mxu0 0.0
    %1530 = vmatpush1.msra.mxu0 0.0
    %1531 = vmatprep.subr.mxu0 %v1493
    %1532 = vmatpush1.msra.mxu0 %v1492
    %1533 = vmatprep.subr.mxu0 %v1491
    %1534 = vmatpush1.msra.mxu0 %v1490
    %1535 = vmatprep.subr.mxu0 %v1468
    %1536 = vmatpush1.msra.mxu0 %v1467
    %1537 = vmatprep.subr.mxu0 %v1466
    %1538 = vmatpush1.msra.mxu0 %v1465
    %1539 = vmatprep.subr.mxu0 %v1443
    %1540 = vmatpush1.msra.mxu0 %v1442
    %1541 = vmatprep.subr.mxu0 %v1441
    %1542 = vmatpush1.msra.mxu0 %v1440
    %1543 = vmatprep.subr.mxu0 %v628
    %1544 = vmatpush1.msra.mxu0 %v626
    %1545 = vmatprep.subr.mxu0 %v622
    %1546 = vmatpush1.msra.mxu0 %v620
    %1547 = vmatprep.subr.mxu0 %v1418
    %1548 = vmatpush1.msra.mxu0 %v1417
    %1549 = vmatprep.subr.mxu0 %v1416
    %1550 = vmatpush1.msra.mxu0 %v1415
    %1551 = vmatprep.subr.mxu0 %v1393
    %1552 = vmatpush1.msra.mxu0 %v1392
    %1553 = vmatprep.subr.mxu0 %v1391
    %1554 = vmatpush1.msra.mxu0 %v1390
    %1555 = vmatprep.subr.mxu0 %v1368
    %1556 = vmatpush1.msra.mxu0 %v1367
    %1557 = vmatprep.subr.mxu0 %v1366
    %1558 = vmatpush1.msra.mxu0 %v1365
    %1559 = vmatprep.subr.mxu0 0.0
    %1560 = vmatpush2.msra.mxu0 0.0
    %1561 = vmatprep.subr.mxu0 0.0
    %1562 = vmatpush2.msra.mxu0 0.0
    %1563 = vmatprep.subr.mxu0 0.0
    %1564 = vmatpush2.msra.mxu0 0.0
    %1565 = vmatprep.subr.mxu0 0.0
    %1566 = vmatpush2.msra.mxu0 0.0
    %1567 = vmatprep.subr.mxu0 0.0
    %1568 = vmatpush2.msra.mxu0 0.0
    %1569 = vmatprep.subr.mxu0 0.0
    %1570 = vmatpush2.msra.mxu0 0.0
    %1571 = vmatprep.subr.mxu0 0.0
    %1572 = vmatpush2.msra.mxu0 0.0
    %1573 = vmatprep.subr.mxu0 0.0
    %1574 = vmatpush2.msra.mxu0 0.0
    %1575 = vmatprep.subr.mxu0 0.0
    %1576 = vmatpush2.msra.mxu0 0.0
    %1577 = vmatprep.subr.mxu0 0.0
    %1578 = vmatpush2.msra.mxu0 0.0
    %1579 = vmatprep.subr.mxu0 0.0
    %1580 = vmatpush2.msra.mxu0 0.0
    %1581 = vmatprep.subr.mxu0 0.0
    %1582 = vmatpush2.msra.mxu0 0.0
    %1583 = vmatprep.subr.mxu0 0.0
    %1584 = vmatpush2.msra.mxu0 0.0
    %1585 = vmatprep.subr.mxu0 0.0
    %1586 = vmatpush2.msra.mxu0 0.0
    %1587 = vmatprep.subr.mxu0 0.0
    %1588 = vmatpush2.msra.mxu0 0.0
    %1589 = vmatprep.subr.mxu0 0.0
    %1590 = vmatpush2.msra.mxu0 0.0
    %1591 = vmatprep.mubr.f32.mxu0 0.0
    %1592 = vmatmul.mubr.f32.gmra.mxu0 %v1504
    %v1593 = vpop.f32.mrf.mxu0
    %v1594 = vadd.f32 0.0, %v1593
    %v1595 = vpop.f32.mrf.mxu0
    %v1596 = vadd.f32 0.0, %v1595
    %1597 = vmatprep.mubr.f32.mxu0 0.0
    %1598 = vmatmul.mubr.f32.gmra.mxu0 %v1507
    %v1599 = vpop.f32.mrf.mxu0
    %v1600 = vadd.f32 0.0, %v1599
    %v1601 = vpop.f32.mrf.mxu0
    %v1602 = vadd.f32 0.0, %v1601
    %1603 = vmatprep.mubr.f32.mxu0 0.0
    %1604 = vmatmul.mubr.f32.gmra.mxu0 %v1510
    %v1605 = vpop.f32.mrf.mxu0
    %v1606 = vadd.f32 0.0, %v1605
    %v1607 = vpop.f32.mrf.mxu0
    %v1608 = vadd.f32 0.0, %v1607
    %1609 = vmatprep.mubr.f32.mxu0 0.0
    %1610 = vmatmul.mubr.f32.gmra.mxu0 %v1513
    %v1611 = vpop.f32.mrf.mxu0
    %v1612 = vadd.f32 0.0, %v1611
    %v1613 = vpop.f32.mrf.mxu0
    %v1614 = vadd.f32 0.0, %v1613
    %1615 = vmatprep.mubr.f32.mxu0 0.0
    %1616 = vmatmul.mubr.f32.gmra.mxu0 %v1516
    %v1617 = vpop.f32.mrf.mxu0
    %v1618 = vadd.f32 0.0, %v1617
    %v1619 = vpop.f32.mrf.mxu0
    %v1620 = vadd.f32 0.0, %v1619
    %1621 = vmatprep.mubr.f32.mxu0 0.0
    %1622 = vmatmul.mubr.f32.gmra.mxu0 %v1519
    %v1623 = vpop.f32.mrf.mxu0
    %v1624 = vadd.f32 0.0, %v1623
    %v1625 = vpop.f32.mrf.mxu0
    %v1626 = vadd.f32 0.0, %v1625
    %1627 = vmatprep.mubr.f32.mxu0 0.0
    %1628 = vmatmul.mubr.f32.gmra.mxu0 %v1522
    %v1629 = vpop.f32.mrf.mxu0
    %v1630 = vadd.f32 0.0, %v1629
    %v1631 = vpop.f32.mrf.mxu0
    %v1632 = vadd.f32 0.0, %v1631
    %1633 = vmatprep.mubr.f32.mxu0 0.0
    %1634 = vmatmul.mubr.f32.gmra.mxu0 %v1525
    %v1635 = vpop.f32.mrf.mxu0
    %v1636 = vadd.f32 0.0, %v1635
    %v1637 = vpop.f32.mrf.mxu0
    %v1638 = vadd.f32 0.0, %v1637
    %1639 = vdwg.mxu0
    %v1640 = vlaneseq
    %v1641 = vshrl.u32 %v1640, 7
    %v1642 = vsub.s32 0, %v1641
    %v1643 = vrot.slane %v1021, %v1642
    %1645 = vbcast.lane.b32.xlu0 %v1643, 256
    %v1646 = vpop.permute.xlu0 %1645
    %s1648 = sor.u32 256, 8
    %1649 = vbcast.lane.b32.xlu0 %v1643, %s1648
    %v1650 = vpop.permute.xlu0 %1649
    %v1651 = vlaneseq
    %v1652 = vshrl.u32 %v1651, 7
    %v1653 = vsub.s32 1, %v1652
    %v1654 = vrot.slane %v1021, %v1653
    %1656 = vbcast.lane.b32.xlu0 %v1654, 256
    %v1657 = vpop.permute.xlu0 %1656
    %s1659 = sor.u32 256, 8
    %1660 = vbcast.lane.b32.xlu0 %v1654, %s1659
    %v1661 = vpop.permute.xlu0 %1660
    %v1662 = vlaneseq
    %v1663 = vshrl.u32 %v1662, 7
    %v1664 = vsub.s32 2, %v1663
    %v1665 = vrot.slane %v1021, %v1664
    %1667 = vbcast.lane.b32.xlu0 %v1665, 256
    %v1668 = vpop.permute.xlu0 %1667
    %s1670 = sor.u32 256, 8
    %1671 = vbcast.lane.b32.xlu0 %v1665, %s1670
    %v1672 = vpop.permute.xlu0 %1671
    %v1673 = vlaneseq
    %v1674 = vshrl.u32 %v1673, 7
    %v1675 = vsub.s32 3, %v1674
    %v1676 = vrot.slane %v1021, %v1675
    %1678 = vbcast.lane.b32.xlu0 %v1676, 256
    %v1679 = vpop.permute.xlu0 %1678
    %s1681 = sor.u32 256, 8
    %1682 = vbcast.lane.b32.xlu0 %v1676, %s1681
    %v1683 = vpop.permute.xlu0 %1682
    %v1684 = vlaneseq
    %v1685 = vshrl.u32 %v1684, 7
    %v1686 = vsub.s32 0, %v1685
    %v1687 = vrot.slane %v1341, %v1686
    %1689 = vbcast.lane.b32.xlu0 %v1687, 256
    %v1690 = vpop.permute.xlu0 %1689
    %s1692 = sor.u32 256, 8
    %1693 = vbcast.lane.b32.xlu0 %v1687, %s1692
    %v1694 = vpop.permute.xlu0 %1693
    %v1695 = vlaneseq
    %v1696 = vshrl.u32 %v1695, 7
    %v1697 = vsub.s32 1, %v1696
    %v1698 = vrot.slane %v1341, %v1697
    %1700 = vbcast.lane.b32.xlu0 %v1698, 256
    %v1701 = vpop.permute.xlu0 %1700
    %s1703 = sor.u32 256, 8
    %1704 = vbcast.lane.b32.xlu0 %v1698, %s1703
    %v1705 = vpop.permute.xlu0 %1704
    %v1706 = vlaneseq
    %v1707 = vshrl.u32 %v1706, 7
    %v1708 = vsub.s32 2, %v1707
    %v1709 = vrot.slane %v1341, %v1708
    %1711 = vbcast.lane.b32.xlu0 %v1709, 256
    %v1712 = vpop.permute.xlu0 %1711
    %s1714 = sor.u32 256, 8
    %1715 = vbcast.lane.b32.xlu0 %v1709, %s1714
    %v1716 = vpop.permute.xlu0 %1715
    %v1717 = vlaneseq
    %v1718 = vshrl.u32 %v1717, 7
    %v1719 = vsub.s32 3, %v1718
    %v1720 = vrot.slane %v1341, %v1719
    %1722 = vbcast.lane.b32.xlu0 %v1720, 256
    %v1723 = vpop.permute.xlu0 %1722
    %s1725 = sor.u32 256, 8
    %1726 = vbcast.lane.b32.xlu0 %v1720, %s1725
    %v1727 = vpop.permute.xlu0 %1726
    %v1728 = vadd.f32 %v1594, %v1646
    %v1729 = vadd.f32 %v1596, %v1690
    %v1730 = vadd.f32 %v1600, %v1650
    %v1731 = vadd.f32 %v1602, %v1694
    %v1732 = vadd.f32 %v1606, %v1657
    %v1733 = vadd.f32 %v1608, %v1701
    %v1734 = vadd.f32 %v1612, %v1661
    %v1735 = vadd.f32 %v1614, %v1705
    %v1736 = vadd.f32 %v1618, %v1668
    %v1737 = vadd.f32 %v1620, %v1712
    %v1738 = vadd.f32 %v1624, %v1672
    %v1739 = vadd.f32 %v1626, %v1716
    %v1740 = vadd.f32 %v1630, %v1679
    %v1741 = vadd.f32 %v1632, %v1723
    %v1742 = vadd.f32 %v1636, %v1683
    %v1743 = vadd.f32 %v1638, %v1727
    %v1744 = vmul.f32 %v1728, %v524
    %v1745 = vmul.f32 %v1729, %v526
    %v1746 = vmul.f32 %v1730, %v530
    %v1747 = vmul.f32 %v1731, %v532
    %v1748 = vmul.f32 %v1732, %v524
    %v1749 = vmul.f32 %v1733, %v526
    %v1750 = vmul.f32 %v1734, %v530
    %v1751 = vmul.f32 %v1735, %v532
    %v1752 = vmul.f32 %v1736, %v524
    %v1753 = vmul.f32 %v1737, %v526
    %v1754 = vmul.f32 %v1738, %v530
    %v1755 = vmul.f32 %v1739, %v532
    %v1756 = vmul.f32 %v1740, %v524
    %v1757 = vmul.f32 %v1741, %v526
    %v1758 = vmul.f32 %v1742, %v530
    %v1759 = vmul.f32 %v1743, %v532
    %v1760 = vadd.f32 %v1744, %v1746
    %v1761 = vrot.slane %v1760, 4
    %v1762 = vadd.f32 %v1760, %v1761
    %v1763 = vrot.slane %v1762, 2
    %v1764 = vadd.f32 %v1762, %v1763
    %v1765 = vrot.slane %v1764, 1
    %v1766 = vadd.f32 %v1764, %v1765
    %v1767 = vadd.f32 %v1745, %v1747
    %v1768 = vrot.slane %v1767, 4
    %v1769 = vadd.f32 %v1767, %v1768
    %v1770 = vrot.slane %v1769, 2
    %v1771 = vadd.f32 %v1769, %v1770
    %v1772 = vrot.slane %v1771, 1
    %v1773 = vadd.f32 %v1771, %v1772
    %v1774 = vadd.f32 %v1748, %v1750
    %v1775 = vrot.slane %v1774, 4
    %v1776 = vadd.f32 %v1774, %v1775
    %v1777 = vrot.slane %v1776, 2
    %v1778 = vadd.f32 %v1776, %v1777
    %v1779 = vrot.slane %v1778, 1
    %v1780 = vadd.f32 %v1778, %v1779
    %v1781 = vadd.f32 %v1749, %v1751
    %v1782 = vrot.slane %v1781, 4
    %v1783 = vadd.f32 %v1781, %v1782
    %v1784 = vrot.slane %v1783, 2
    %v1785 = vadd.f32 %v1783, %v1784
    %v1786 = vrot.slane %v1785, 1
    %v1787 = vadd.f32 %v1785, %v1786
    %v1788 = vadd.f32 %v1752, %v1754
    %v1789 = vrot.slane %v1788, 4
    %v1790 = vadd.f32 %v1788, %v1789
    %v1791 = vrot.slane %v1790, 2
    %v1792 = vadd.f32 %v1790, %v1791
    %v1793 = vrot.slane %v1792, 1
    %v1794 = vadd.f32 %v1792, %v1793
    %v1795 = vadd.f32 %v1753, %v1755
    %v1796 = vrot.slane %v1795, 4
    %v1797 = vadd.f32 %v1795, %v1796
    %v1798 = vrot.slane %v1797, 2
    %v1799 = vadd.f32 %v1797, %v1798
    %v1800 = vrot.slane %v1799, 1
    %v1801 = vadd.f32 %v1799, %v1800
    %v1802 = vadd.f32 %v1756, %v1758
    %v1803 = vrot.slane %v1802, 4
    %v1804 = vadd.f32 %v1802, %v1803
    %v1805 = vrot.slane %v1804, 2
    %v1806 = vadd.f32 %v1804, %v1805
    %v1807 = vrot.slane %v1806, 1
    %v1808 = vadd.f32 %v1806, %v1807
    %v1809 = vadd.f32 %v1757, %v1759
    %v1810 = vrot.slane %v1809, 4
    %v1811 = vadd.f32 %v1809, %v1810
    %v1812 = vrot.slane %v1811, 2
    %v1813 = vadd.f32 %v1811, %v1812
    %v1814 = vrot.slane %v1813, 1
    %v1815 = vadd.f32 %v1813, %v1814
    %v1816 = vmul.f32 %v1728, %v536
    %v1817 = vmul.f32 %v1729, %v538
    %v1818 = vmul.f32 %v1730, %v542
    %v1819 = vmul.f32 %v1731, %v544
    %v1820 = vmul.f32 %v1732, %v536
    %v1821 = vmul.f32 %v1733, %v538
    %v1822 = vmul.f32 %v1734, %v542
    %v1823 = vmul.f32 %v1735, %v544
    %v1824 = vmul.f32 %v1736, %v536
    %v1825 = vmul.f32 %v1737, %v538
    %v1826 = vmul.f32 %v1738, %v542
    %v1827 = vmul.f32 %v1739, %v544
    %v1828 = vmul.f32 %v1740, %v536
    %v1829 = vmul.f32 %v1741, %v538
    %v1830 = vmul.f32 %v1742, %v542
    %v1831 = vmul.f32 %v1743, %v544
    %v1832 = vadd.f32 %v1816, %v1818
    %v1833 = vrot.slane %v1832, 4
    %v1834 = vadd.f32 %v1832, %v1833
    %v1835 = vrot.slane %v1834, 2
    %v1836 = vadd.f32 %v1834, %v1835
    %v1837 = vrot.slane %v1836, 1
    %v1838 = vadd.f32 %v1836, %v1837
    %v1839 = vadd.f32 %v1817, %v1819
    %v1840 = vrot.slane %v1839, 4
    %v1841 = vadd.f32 %v1839, %v1840
    %v1842 = vrot.slane %v1841, 2
    %v1843 = vadd.f32 %v1841, %v1842
    %v1844 = vrot.slane %v1843, 1
    %v1845 = vadd.f32 %v1843, %v1844
    %v1846 = vadd.f32 %v1820, %v1822
    %v1847 = vrot.slane %v1846, 4
    %v1848 = vadd.f32 %v1846, %v1847
    %v1849 = vrot.slane %v1848, 2
    %v1850 = vadd.f32 %v1848, %v1849
    %v1851 = vrot.slane %v1850, 1
    %v1852 = vadd.f32 %v1850, %v1851
    %v1853 = vadd.f32 %v1821, %v1823
    %v1854 = vrot.slane %v1853, 4
    %v1855 = vadd.f32 %v1853, %v1854
    %v1856 = vrot.slane %v1855, 2
    %v1857 = vadd.f32 %v1855, %v1856
    %v1858 = vrot.slane %v1857, 1
    %v1859 = vadd.f32 %v1857, %v1858
    %v1860 = vadd.f32 %v1824, %v1826
    %v1861 = vrot.slane %v1860, 4
    %v1862 = vadd.f32 %v1860, %v1861
    %v1863 = vrot.slane %v1862, 2
    %v1864 = vadd.f32 %v1862, %v1863
    %v1865 = vrot.slane %v1864, 1
    %v1866 = vadd.f32 %v1864, %v1865
    %v1867 = vadd.f32 %v1825, %v1827
    %v1868 = vrot.slane %v1867, 4
    %v1869 = vadd.f32 %v1867, %v1868
    %v1870 = vrot.slane %v1869, 2
    %v1871 = vadd.f32 %v1869, %v1870
    %v1872 = vrot.slane %v1871, 1
    %v1873 = vadd.f32 %v1871, %v1872
    %v1874 = vadd.f32 %v1828, %v1830
    %v1875 = vrot.slane %v1874, 4
    %v1876 = vadd.f32 %v1874, %v1875
    %v1877 = vrot.slane %v1876, 2
    %v1878 = vadd.f32 %v1876, %v1877
    %v1879 = vrot.slane %v1878, 1
    %v1880 = vadd.f32 %v1878, %v1879
    %v1881 = vadd.f32 %v1829, %v1831
    %v1882 = vrot.slane %v1881, 4
    %v1883 = vadd.f32 %v1881, %v1882
    %v1884 = vrot.slane %v1883, 2
    %v1885 = vadd.f32 %v1883, %v1884
    %v1886 = vrot.slane %v1885, 1
    %v1887 = vadd.f32 %v1885, %v1886
    %v1888 = vmul.f32 %v1728, %v548
    %v1889 = vmul.f32 %v1729, %v550
    %v1890 = vmul.f32 %v1730, %v554
    %v1891 = vmul.f32 %v1731, %v556
    %v1892 = vmul.f32 %v1732, %v548
    %v1893 = vmul.f32 %v1733, %v550
    %v1894 = vmul.f32 %v1734, %v554
    %v1895 = vmul.f32 %v1735, %v556
    %v1896 = vmul.f32 %v1736, %v548
    %v1897 = vmul.f32 %v1737, %v550
    %v1898 = vmul.f32 %v1738, %v554
    %v1899 = vmul.f32 %v1739, %v556
    %v1900 = vmul.f32 %v1740, %v548
    %v1901 = vmul.f32 %v1741, %v550
    %v1902 = vmul.f32 %v1742, %v554
    %v1903 = vmul.f32 %v1743, %v556
    %v1904 = vadd.f32 %v1888, %v1890
    %v1905 = vrot.slane %v1904, 4
    %v1906 = vadd.f32 %v1904, %v1905
    %v1907 = vrot.slane %v1906, 2
    %v1908 = vadd.f32 %v1906, %v1907
    %v1909 = vrot.slane %v1908, 1
    %v1910 = vadd.f32 %v1908, %v1909
    %v1911 = vadd.f32 %v1889, %v1891
    %v1912 = vrot.slane %v1911, 4
    %v1913 = vadd.f32 %v1911, %v1912
    %v1914 = vrot.slane %v1913, 2
    %v1915 = vadd.f32 %v1913, %v1914
    %v1916 = vrot.slane %v1915, 1
    %v1917 = vadd.f32 %v1915, %v1916
    %v1918 = vadd.f32 %v1892, %v1894
    %v1919 = vrot.slane %v1918, 4
    %v1920 = vadd.f32 %v1918, %v1919
    %v1921 = vrot.slane %v1920, 2
    %v1922 = vadd.f32 %v1920, %v1921
    %v1923 = vrot.slane %v1922, 1
    %v1924 = vadd.f32 %v1922, %v1923
    %v1925 = vadd.f32 %v1893, %v1895
    %v1926 = vrot.slane %v1925, 4
    %v1927 = vadd.f32 %v1925, %v1926
    %v1928 = vrot.slane %v1927, 2
    %v1929 = vadd.f32 %v1927, %v1928
    %v1930 = vrot.slane %v1929, 1
    %v1931 = vadd.f32 %v1929, %v1930
    %v1932 = vadd.f32 %v1896, %v1898
    %v1933 = vrot.slane %v1932, 4
    %v1934 = vadd.f32 %v1932, %v1933
    %v1935 = vrot.slane %v1934, 2
    %v1936 = vadd.f32 %v1934, %v1935
    %v1937 = vrot.slane %v1936, 1
    %v1938 = vadd.f32 %v1936, %v1937
    %v1939 = vadd.f32 %v1897, %v1899
    %v1940 = vrot.slane %v1939, 4
    %v1941 = vadd.f32 %v1939, %v1940
    %v1942 = vrot.slane %v1941, 2
    %v1943 = vadd.f32 %v1941, %v1942
    %v1944 = vrot.slane %v1943, 1
    %v1945 = vadd.f32 %v1943, %v1944
    %v1946 = vadd.f32 %v1900, %v1902
    %v1947 = vrot.slane %v1946, 4
    %v1948 = vadd.f32 %v1946, %v1947
    %v1949 = vrot.slane %v1948, 2
    %v1950 = vadd.f32 %v1948, %v1949
    %v1951 = vrot.slane %v1950, 1
    %v1952 = vadd.f32 %v1950, %v1951
    %v1953 = vadd.f32 %v1901, %v1903
    %v1954 = vrot.slane %v1953, 4
    %v1955 = vadd.f32 %v1953, %v1954
    %v1956 = vrot.slane %v1955, 2
    %v1957 = vadd.f32 %v1955, %v1956
    %v1958 = vrot.slane %v1957, 1
    %v1959 = vadd.f32 %v1957, %v1958
    %v1960 = vmul.f32 %v1728, %v560
    %v1961 = vmul.f32 %v1729, %v562
    %v1962 = vmul.f32 %v1730, %v566
    %v1963 = vmul.f32 %v1731, %v568
    %v1964 = vmul.f32 %v1732, %v560
    %v1965 = vmul.f32 %v1733, %v562
    %v1966 = vmul.f32 %v1734, %v566
    %v1967 = vmul.f32 %v1735, %v568
    %v1968 = vmul.f32 %v1736, %v560
    %v1969 = vmul.f32 %v1737, %v562
    %v1970 = vmul.f32 %v1738, %v566
    %v1971 = vmul.f32 %v1739, %v568
    %v1972 = vmul.f32 %v1740, %v560
    %v1973 = vmul.f32 %v1741, %v562
    %v1974 = vmul.f32 %v1742, %v566
    %v1975 = vmul.f32 %v1743, %v568
    %v1976 = vadd.f32 %v1960, %v1962
    %v1977 = vrot.slane %v1976, 4
    %v1978 = vadd.f32 %v1976, %v1977
    %v1979 = vrot.slane %v1978, 2
    %v1980 = vadd.f32 %v1978, %v1979
    %v1981 = vrot.slane %v1980, 1
    %v1982 = vadd.f32 %v1980, %v1981
    %v1983 = vadd.f32 %v1961, %v1963
    %v1984 = vrot.slane %v1983, 4
    %v1985 = vadd.f32 %v1983, %v1984
    %v1986 = vrot.slane %v1985, 2
    %v1987 = vadd.f32 %v1985, %v1986
    %v1988 = vrot.slane %v1987, 1
    %v1989 = vadd.f32 %v1987, %v1988
    %v1990 = vadd.f32 %v1964, %v1966
    %v1991 = vrot.slane %v1990, 4
    %v1992 = vadd.f32 %v1990, %v1991
    %v1993 = vrot.slane %v1992, 2
    %v1994 = vadd.f32 %v1992, %v1993
    %v1995 = vrot.slane %v1994, 1
    %v1996 = vadd.f32 %v1994, %v1995
    %v1997 = vadd.f32 %v1965, %v1967
    %v1998 = vrot.slane %v1997, 4
    %v1999 = vadd.f32 %v1997, %v1998
    %v2000 = vrot.slane %v1999, 2
    %v2001 = vadd.f32 %v1999, %v2000
    %v2002 = vrot.slane %v2001, 1
    %v2003 = vadd.f32 %v2001, %v2002
    %v2004 = vadd.f32 %v1968, %v1970
    %v2005 = vrot.slane %v2004, 4
    %v2006 = vadd.f32 %v2004, %v2005
    %v2007 = vrot.slane %v2006, 2
    %v2008 = vadd.f32 %v2006, %v2007
    %v2009 = vrot.slane %v2008, 1
    %v2010 = vadd.f32 %v2008, %v2009
    %v2011 = vadd.f32 %v1969, %v1971
    %v2012 = vrot.slane %v2011, 4
    %v2013 = vadd.f32 %v2011, %v2012
    %v2014 = vrot.slane %v2013, 2
    %v2015 = vadd.f32 %v2013, %v2014
    %v2016 = vrot.slane %v2015, 1
    %v2017 = vadd.f32 %v2015, %v2016
    %v2018 = vadd.f32 %v1972, %v1974
    %v2019 = vrot.slane %v2018, 4
    %v2020 = vadd.f32 %v2018, %v2019
    %v2021 = vrot.slane %v2020, 2
    %v2022 = vadd.f32 %v2020, %v2021
    %v2023 = vrot.slane %v2022, 1
    %v2024 = vadd.f32 %v2022, %v2023
    %v2025 = vadd.f32 %v1973, %v1975
    %v2026 = vrot.slane %v2025, 4
    %v2027 = vadd.f32 %v2025, %v2026
    %v2028 = vrot.slane %v2027, 2
    %v2029 = vadd.f32 %v2027, %v2028
    %v2030 = vrot.slane %v2029, 1
    %v2031 = vadd.f32 %v2029, %v2030
    %vm2040 = vcmask 1041409
    %v2041 = vsel %vm2040, %v1780, %v1766
    %vm2042 = vcmask 1042434
    %v2043 = vsel %vm2042, %v1794, %v2041
    %vm2044 = vcmask 1043459
    %v2045 = vsel %vm2044, %v1808, %v2043
    %v2046 = vsel %vm2040, %v1787, %v1773
    %v2047 = vsel %vm2042, %v1801, %v2046
    %v2048 = vsel %vm2044, %v1815, %v2047
    %vm2059 = vcmask 1045509
    %v2060 = vsel %vm2059, %v1852, %v1838
    %vm2061 = vcmask 1046534
    %v2062 = vsel %vm2061, %v1866, %v2060
    %vm2063 = vcmask 1047559
    %v2064 = vsel %vm2063, %v1880, %v2062
    %v2065 = vsel %vm2059, %v1859, %v1845
    %v2066 = vsel %vm2061, %v1873, %v2065
    %v2067 = vsel %vm2063, %v1887, %v2066
    %v2078 = vsel %vm2040, %v1924, %v1910
    %v2079 = vsel %vm2042, %v1938, %v2078
    %v2080 = vsel %vm2044, %v1952, %v2079
    %v2081 = vsel %vm2040, %v1931, %v1917
    %v2082 = vsel %vm2042, %v1945, %v2081
    %v2083 = vsel %vm2044, %v1959, %v2082
    %v2094 = vsel %vm2059, %v1996, %v1982
    %v2095 = vsel %vm2061, %v2010, %v2094
    %v2096 = vsel %vm2063, %v2024, %v2095
    %v2097 = vsel %vm2059, %v2003, %v1989
    %v2098 = vsel %vm2061, %v2017, %v2097
    %v2099 = vsel %vm2063, %v2031, %v2098
    %vm2102 = vcmask 1043456
    %v2103 = vsel %vm2102, %v2045, %v2064
    %v2104 = vsel %vm2102, %v2048, %v2067
    %v2105 = vsel %vm2102, %v2080, %v2096
    %v2106 = vsel %vm2102, %v2083, %v2099
    %2107 = vrot.lane.b32.xlu0 %v2103, 1
    %v2108 = vpop.permute.xlu0 %2107
    %2109 = vrot.lane.b32.xlu0 %v2105, 1
    %v2110 = vpop.permute.xlu0 %2109
    %2111 = vrot.lane.b32.xlu0 %v2104, 1
    %v2112 = vpop.permute.xlu0 %2111
    %2113 = vrot.lane.b32.xlu0 %v2106, 1
    %v2114 = vpop.permute.xlu0 %2113
    %v2115 = vsel %vm1402, %v2108, %v2112
    %v2116 = vsel %vm1402, %v2110, %v2114
    %v2117 = vsel %vm1402, %v2112, %v2108
    %v2118 = vsel %vm1402, %v2114, %v2110
    %v2119 = vmul.f32 %v2117, %v1410
    %v2120 = vmul.f32 %v2115, %v1414
    %v2121 = vmul.f32 %v2118, %v1410
    %v2122 = vmul.f32 %v2116, %v1414
    %v2123 = vadd.f32 %v2119, %v2103
    %v2124 = vadd.f32 %v2120, %v2104
    %v2125 = vadd.f32 %v2121, %v2105
    %v2126 = vadd.f32 %v2122, %v2106
    %2127 = vrot.lane.b32.xlu0 %v2103, 127
    %v2128 = vpop.permute.xlu0 %2127
    %2129 = vrot.lane.b32.xlu0 %v2105, 127
    %v2130 = vpop.permute.xlu0 %2129
    %2131 = vrot.lane.b32.xlu0 %v2104, 127
    %v2132 = vpop.permute.xlu0 %2131
    %2133 = vrot.lane.b32.xlu0 %v2106, 127
    %v2134 = vpop.permute.xlu0 %2133
    %v2135 = vsel %vm1427, %v2128, %v2132
    %v2136 = vsel %vm1427, %v2130, %v2134
    %v2137 = vsel %vm1427, %v2132, %v2128
    %v2138 = vsel %vm1427, %v2134, %v2130
    %v2139 = vmul.f32 %v2135, %v1435
    %v2140 = vmul.f32 %v2137, %v1439
    %v2141 = vmul.f32 %v2136, %v1435
    %v2142 = vmul.f32 %v2138, %v1439
    %v2143 = vadd.f32 %v2123, %v2139
    %v2144 = vadd.f32 %v2124, %v2140
    %v2145 = vadd.f32 %v2125, %v2141
    %v2146 = vadd.f32 %v2126, %v2142
    %v2147 = vmul.f32 %v2143, 0.33333334
    %v2148 = vmul.f32 %v2144, 0.33333334
    %v2149 = vmul.f32 %v2145, 0.33333334
    %v2150 = vmul.f32 %v2146, 0.33333334
    %2152 = vset.pattern.permute.xlu0 0
    %2153 = vperm.xlu0 %2152, %v85
    %v2154 = vpop.permute.xlu0 %2153
    %2157 = vset.pattern.permute.xlu0 0
    %2158 = vperm.xlu0 %2157, %v86
    %v2159 = vpop.permute.xlu0 %2158
    %v2161 = vmul.f32 %v2147, %v2154
    %v2162 = vmul.f32 %v2148, %v2154
    %v2163 = vmul.f32 %v2149, %v2159
    %v2164 = vmul.f32 %v2150, %v2159
    %2166 = vset.pattern.permute.xlu0 0
    %2167 = vperm.xlu0 %2166, %v87
    %v2168 = vpop.permute.xlu0 %2167
    %2171 = vset.pattern.permute.xlu0 0
    %2172 = vperm.xlu0 %2171, %v88
    %v2173 = vpop.permute.xlu0 %2172
    %v2175 = vadd.f32 %v2161, %v2168
    %v2176 = vadd.f32 %v2162, %v2168
    %v2177 = vadd.f32 %v2163, %v2173
    %v2178 = vadd.f32 %v2164, %v2173
    %v2179 = vmax.f32 %v2175, 0.0
    %v2180 = vmax.f32 %v2176, 0.0
    %v2181 = vmax.f32 %v2177, 0.0
    %v2182 = vmax.f32 %v2178, 0.0
    %2184 = vset.pattern.permute.xlu0 0
    %2185 = vperm.xlu0 %2184, %v89
    %v2186 = vpop.permute.xlu0 %2185
    %2189 = vset.pattern.permute.xlu0 0
    %2190 = vperm.xlu0 %2189, %v90
    %v2191 = vpop.permute.xlu0 %2190
    %2194 = vset.pattern.permute.xlu0 0
    %2195 = vperm.xlu0 %2194, %v91
    %v2196 = vpop.permute.xlu0 %2195
    %2199 = vset.pattern.permute.xlu0 0
    %2200 = vperm.xlu0 %2199, %v92
    %v2201 = vpop.permute.xlu0 %2200
    %2204 = vset.pattern.permute.xlu0 0
    %2205 = vperm.xlu0 %2204, %v93
    %v2206 = vpop.permute.xlu0 %2205
    %2209 = vset.pattern.permute.xlu0 0
    %2210 = vperm.xlu0 %2209, %v94
    %v2211 = vpop.permute.xlu0 %2210
    %2214 = vset.pattern.permute.xlu0 0
    %2215 = vperm.xlu0 %2214, %v95
    %v2216 = vpop.permute.xlu0 %2215
    %2219 = vset.pattern.permute.xlu0 0
    %2220 = vperm.xlu0 %2219, %v96
    %v2221 = vpop.permute.xlu0 %2220
    %v2224 = vsel %vm153, %v49, 0
    %v2227 = vsel %vm153, %v50, 0
    %v2230 = vsel %vm153, %v51, 0
    %v2233 = vsel %vm153, %v52, 0
    %v2236 = vsel %vm153, %v53, 0
    %v2239 = vsel %vm153, %v54, 0
    %v2242 = vsel %vm153, %v55, 0
    %v2245 = vsel %vm153, %v56, 0
    %2247 = vmatprep.subr.mxu0 0.0
    %2248 = vmatpush1.msra.mxu0 0.0
    %2249 = vmatprep.subr.mxu0 0.0
    %2250 = vmatpush1.msra.mxu0 0.0
    %2251 = vmatprep.subr.mxu0 0.0
    %2252 = vmatpush1.msra.mxu0 0.0
    %2253 = vmatprep.subr.mxu0 0.0
    %2254 = vmatpush1.msra.mxu0 0.0
    %2255 = vmatprep.subr.mxu0 0.0
    %2256 = vmatpush1.msra.mxu0 0.0
    %2257 = vmatprep.subr.mxu0 0.0
    %2258 = vmatpush1.msra.mxu0 0.0
    %2259 = vmatprep.subr.mxu0 0.0
    %2260 = vmatpush1.msra.mxu0 0.0
    %2261 = vmatprep.subr.mxu0 0.0
    %2262 = vmatpush1.msra.mxu0 0.0
    %2263 = vmatprep.subr.mxu0 0.0
    %2264 = vmatpush1.msra.mxu0 0.0
    %2265 = vmatprep.subr.mxu0 0.0
    %2266 = vmatpush1.msra.mxu0 0.0
    %2267 = vmatprep.subr.mxu0 0.0
    %2268 = vmatpush1.msra.mxu0 0.0
    %2269 = vmatprep.subr.mxu0 0.0
    %2270 = vmatpush1.msra.mxu0 0.0
    %2271 = vmatprep.subr.mxu0 0.0
    %2272 = vmatpush1.msra.mxu0 0.0
    %2273 = vmatprep.subr.mxu0 0.0
    %2274 = vmatpush1.msra.mxu0 0.0
    %2275 = vmatprep.subr.mxu0 %v2182
    %2276 = vmatpush1.msra.mxu0 %v2181
    %2277 = vmatprep.subr.mxu0 %v2180
    %2278 = vmatpush1.msra.mxu0 %v2179
    %2279 = vmatprep.subr.mxu0 0.0
    %2280 = vmatpush2.msra.mxu0 0.0
    %2281 = vmatprep.subr.mxu0 0.0
    %2282 = vmatpush2.msra.mxu0 0.0
    %2283 = vmatprep.subr.mxu0 0.0
    %2284 = vmatpush2.msra.mxu0 0.0
    %2285 = vmatprep.subr.mxu0 0.0
    %2286 = vmatpush2.msra.mxu0 0.0
    %2287 = vmatprep.subr.mxu0 0.0
    %2288 = vmatpush2.msra.mxu0 0.0
    %2289 = vmatprep.subr.mxu0 0.0
    %2290 = vmatpush2.msra.mxu0 0.0
    %2291 = vmatprep.subr.mxu0 0.0
    %2292 = vmatpush2.msra.mxu0 0.0
    %2293 = vmatprep.subr.mxu0 0.0
    %2294 = vmatpush2.msra.mxu0 0.0
    %2295 = vmatprep.subr.mxu0 0.0
    %2296 = vmatpush2.msra.mxu0 0.0
    %2297 = vmatprep.subr.mxu0 0.0
    %2298 = vmatpush2.msra.mxu0 0.0
    %2299 = vmatprep.subr.mxu0 0.0
    %2300 = vmatpush2.msra.mxu0 0.0
    %2301 = vmatprep.subr.mxu0 0.0
    %2302 = vmatpush2.msra.mxu0 0.0
    %2303 = vmatprep.subr.mxu0 0.0
    %2304 = vmatpush2.msra.mxu0 0.0
    %2305 = vmatprep.subr.mxu0 0.0
    %2306 = vmatpush2.msra.mxu0 0.0
    %2307 = vmatprep.subr.mxu0 0.0
    %2308 = vmatpush2.msra.mxu0 0.0
    %2309 = vmatprep.subr.mxu0 0.0
    %2310 = vmatpush2.msra.mxu0 0.0
    %2311 = vmatprep.mubr.f32.mxu0 0.0
    %2312 = vmatmul.mubr.f32.gmra.mxu0 %v2224
    %v2313 = vpop.f32.mrf.mxu0
    %v2314 = vadd.f32 %v2186, %v2313
    %v2315 = vpop.f32.mrf.mxu0
    %v2316 = vadd.f32 %v2186, %v2315
    %2317 = vmatprep.mubr.f32.mxu0 0.0
    %2318 = vmatmul.mubr.f32.gmra.mxu0 %v2227
    %v2319 = vpop.f32.mrf.mxu0
    %v2320 = vadd.f32 %v2191, %v2319
    %v2321 = vpop.f32.mrf.mxu0
    %v2322 = vadd.f32 %v2191, %v2321
    %2323 = vmatprep.mubr.f32.mxu0 0.0
    %2324 = vmatmul.mubr.f32.gmra.mxu0 %v2230
    %v2325 = vpop.f32.mrf.mxu0
    %v2326 = vadd.f32 %v2196, %v2325
    %v2327 = vpop.f32.mrf.mxu0
    %v2328 = vadd.f32 %v2196, %v2327
    %2329 = vmatprep.mubr.f32.mxu0 0.0
    %2330 = vmatmul.mubr.f32.gmra.mxu0 %v2233
    %v2331 = vpop.f32.mrf.mxu0
    %v2332 = vadd.f32 %v2201, %v2331
    %v2333 = vpop.f32.mrf.mxu0
    %v2334 = vadd.f32 %v2201, %v2333
    %2335 = vmatprep.mubr.f32.mxu0 0.0
    %2336 = vmatmul.mubr.f32.gmra.mxu0 %v2236
    %v2337 = vpop.f32.mrf.mxu0
    %v2338 = vadd.f32 %v2206, %v2337
    %v2339 = vpop.f32.mrf.mxu0
    %v2340 = vadd.f32 %v2206, %v2339
    %2341 = vmatprep.mubr.f32.mxu0 0.0
    %2342 = vmatmul.mubr.f32.gmra.mxu0 %v2239
    %v2343 = vpop.f32.mrf.mxu0
    %v2344 = vadd.f32 %v2211, %v2343
    %v2345 = vpop.f32.mrf.mxu0
    %v2346 = vadd.f32 %v2211, %v2345
    %2347 = vmatprep.mubr.f32.mxu0 0.0
    %2348 = vmatmul.mubr.f32.gmra.mxu0 %v2242
    %v2349 = vpop.f32.mrf.mxu0
    %v2350 = vadd.f32 %v2216, %v2349
    %v2351 = vpop.f32.mrf.mxu0
    %v2352 = vadd.f32 %v2216, %v2351
    %2353 = vmatprep.mubr.f32.mxu0 0.0
    %2354 = vmatmul.mubr.f32.gmra.mxu0 %v2245
    %v2355 = vpop.f32.mrf.mxu0
    %v2356 = vadd.f32 %v2221, %v2355
    %v2357 = vpop.f32.mrf.mxu0
    %v2358 = vadd.f32 %v2221, %v2357
    %2359 = vdwg.mxu0
    %v2360 = vadd.f32 %v2314, %v263
    %v2361 = vadd.f32 %v2316, %v265
    %v2362 = vadd.f32 %v2320, %v269
    %v2363 = vadd.f32 %v2322, %v271
    %v2364 = vadd.f32 %v2326, %v275
    %v2365 = vadd.f32 %v2328, %v277
    %v2366 = vadd.f32 %v2332, %v281
    %v2367 = vadd.f32 %v2334, %v283
    %v2368 = vadd.f32 %v2338, %v287
    %v2369 = vadd.f32 %v2340, %v289
    %v2370 = vadd.f32 %v2344, %v293
    %v2371 = vadd.f32 %v2346, %v295
    %v2372 = vadd.f32 %v2350, %v299
    %v2373 = vadd.f32 %v2352, %v301
    %v2374 = vadd.f32 %v2356, %v305
    %v2375 = vadd.f32 %v2358, %v307
    %v2376 = vmax.f32 %v2360, 0.0
    %v2377 = vmax.f32 %v2361, 0.0
    %v2378 = vmax.f32 %v2362, 0.0
    %v2379 = vmax.f32 %v2363, 0.0
    %v2380 = vmax.f32 %v2364, 0.0
    %v2381 = vmax.f32 %v2365, 0.0
    %v2382 = vmax.f32 %v2366, 0.0
    %v2383 = vmax.f32 %v2367, 0.0
    %v2384 = vmax.f32 %v2368, 0.0
    %v2385 = vmax.f32 %v2369, 0.0
    %v2386 = vmax.f32 %v2370, 0.0
    %v2387 = vmax.f32 %v2371, 0.0
    %v2388 = vmax.f32 %v2372, 0.0
    %v2389 = vmax.f32 %v2373, 0.0
    %v2390 = vmax.f32 %v2374, 0.0
    %v2391 = vmax.f32 %v2375, 0.0
    %2392 = vst [vmem:[#allocation2] sm:$0xff] %v2376
    %2393 = vst [vmem:[#allocation2 + $0x8] sm:$0xff] %v2378
    %2394 = vst [vmem:[#allocation2 + $0x10] sm:$0xff] %v2380
    %2395 = vst [vmem:[#allocation2 + $0x18] sm:$0xff] %v2382
    %2396 = vst [vmem:[#allocation2 + $0x20] sm:$0xff] %v2384
    %2397 = vst [vmem:[#allocation2 + $0x28] sm:$0xff] %v2386
    %2398 = vst [vmem:[#allocation2 + $0x30] sm:$0xff] %v2388
    %2399 = vst [vmem:[#allocation2 + $0x38] sm:$0xff] %v2390
    %s2400 = scalar_lea.vmem [#allocation2], 64
    %2401 = vst [vmem:[%s2400] sm:$0xff] %v2377
    %2402 = vst [vmem:[%s2400 + $0x8] sm:$0xff] %v2379
    %2403 = vst [vmem:[%s2400 + $0x10] sm:$0xff] %v2381
    %2404 = vst [vmem:[%s2400 + $0x18] sm:$0xff] %v2383
    %2405 = vst [vmem:[%s2400 + $0x20] sm:$0xff] %v2385
    %2406 = vst [vmem:[%s2400 + $0x28] sm:$0xff] %v2387
    %2407 = vst [vmem:[%s2400 + $0x30] sm:$0xff] %v2389
    %2408 = vst [vmem:[%s2400 + $0x38] sm:$0xff] %v2391
    // Predicated region
    $region22: #{tpu_custom_call.1} parent=1 // pred_check
      _
    $region23: #{tpu_custom_call.1} parent=1 // pred_check_branch
      %2410 = sbr.rel (0) target = $region25
    $region24: #{tpu_custom_call.1} parent=1 // pred_region
      %s2412 = ssub.s32 2048, 2048
      %2413 = vsyncadd [#allocation3], %s2412
      %s2414 = sshll.u32 [#allocation2], 4
      %s2415 = int_to_ptr.vmem [resolvable:$true] %s2414
      %2420 = dma.vmem_to_hbm [thread:$0]  %s2415, 2048, %s5, [#allocation3], 128, 128, 8
    $region25: #{tpu_custom_call.1} parent=1 // pred_fallthru
      _
    // Predicated region
    $region26: #{tpu_custom_call.1} parent=1 // pred_check
      _
    $region27: #{tpu_custom_call.1} parent=1 // pred_check_branch
      %2422 = sbr.rel (0) target = $region29
    $region28: #{tpu_custom_call.1} parent=1 // pred_region
      %2423 = dma.done [#allocation3], 2048
    $region29: #{tpu_custom_call.1} parent=1 // pred_fallthru
      _
    %2424 = vsyncpa [#allocation3], 1

</llo_original>
